<compile_context>
chip_gen: v7x
topology: tpu7x:2x2x1
jax: 0.10.0
libtpu: 0.0.40
codegen_flags: <defaults>
</compile_context>

<pallas_src>
import functools

import jax
import jax.numpy as jnp
import numpy as np
from jax.experimental import pallas as pl
from jax.experimental.pallas import tpu as pltpu


# ----------------------------------------------------------------------------
# Fused Pallas kernel: in-kernel im2col -> one MXU matmul -> tanh -> V conv
# ----------------------------------------------------------------------------
def _attention_kernel(h_ref, x_ref, w_ref, vw_ref, out_ref,
                      act_pad_ref, im2col_ref, attn_pad_ref,
                      *, N, L, kernel_size, pad_left, C_hid, C_in, C_pad):
    k = kernel_size
    p = k // 2
    C_tot = C_hid + C_in
    C_attn = vw_ref.shape[0]

    # ---- Zero only the halo pad columns + padded channel rows --------------
    # (done every step: scratch is per-core and the batch axis is "parallel",
    #  so a @pl.when(pid==0) init could be skipped on one megacore half).
    if pad_left > 0:
        act_pad_ref[:, :pad_left] = jnp.zeros((C_pad, pad_left),
                                              act_pad_ref.dtype)
        act_pad_ref[:, pad_left + L:pad_left + L + pad_left] = jnp.zeros(
            (C_pad, pad_left), act_pad_ref.dtype)
        attn_pad_ref[:, :pad_left] = jnp.zeros((C_attn, pad_left),
                                               attn_pad_ref.dtype)
        attn_pad_ref[:, pad_left + L:pad_left + L + pad_left] = jnp.zeros(
            (C_attn, pad_left), attn_pad_ref.dtype)
    if C_pad > C_tot:
        act_pad_ref[C_tot:, pad_left:pad_left + L] = jnp.zeros(
            (C_pad - C_tot, L), act_pad_ref.dtype)

    # ---- Stage 0: in-kernel im2col of the raw activations ------------------
    # Write the raw (bf16 in HBM) activations into a zero-padded flat f32
    # scratch; every shifted tap is then a static lane-offset slice of it.
    act_pad_ref[:C_hid, pad_left:pad_left + L] = h_ref[0].astype(jnp.float32)
    act_pad_ref[C_hid:C_tot, pad_left:pad_left + L] = x_ref[0].astype(
        jnp.float32)

    # Column index of each flattened spatial position (for row-wrap masking);
    # the validity mask only depends on dx, so it is computed once per dx.
    col_in = jax.lax.broadcasted_iota(jnp.int32, (C_pad, L), 1) % N
    for dx in range(k):
        if dx != p:
            valid_in = (col_in >= (p - dx)) & (col_in < (N + p - dx))
        for dy in range(k):
            t = dy * k + dx
            start = pad_left + (dy - p) * N + (dx - p)
            shifted = act_pad_ref[:, start:start + L]
            if dx == p:               # no column wrap possible for dx == p
                tap = shifted
            else:
                tap = jnp.where(valid_in, shifted, 0.0)
            # Aligned 16-row bf16 band store (C_pad is a multiple of 16).
            im2col_ref[t * C_pad:(t + 1) * C_pad, :] = tap.astype(
                im2col_ref.dtype)

    # ---- Stage 1: H(hidden)+W(input) as ONE folded-K bf16 MXU matmul -------
    # (C_attn, kk*C_pad) @ (kk*C_pad, L) with f32 accumulation; tanh on EUP.
    attn = jnp.tanh(jnp.dot(w_ref[...], im2col_ref[...],
                            preferred_element_type=jnp.float32))

    # ---- Stage 2: V conv, fully VMEM-resident (f32) -------------------------
    attn_pad_ref[:, pad_left:pad_left + L] = attn
    col_at = jax.lax.broadcasted_iota(jnp.int32, (C_attn, L), 1) % N

    center = p * k + p
    acc = attn * vw_ref[:, center:center + 1]        # center tap: in-register
    for dx in range(k):
        group = None
        for dy in range(k):
            if dy == p and dx == p:
                continue                              # center tap done above
            t = dy * k + dx
            start = pad_left + (dy - p) * N + (dx - p)
            term = attn_pad_ref[:, start:start + L] * vw_ref[:, t:t + 1]
            group = term if group is None else group + term
        if group is None:
            continue
        if dx == p:                                   # mask is trivially true
            acc = acc + group
        else:                                         # one select per dx group
            valid = (col_at >= (p - dx)) & (col_at < (N + p - dx))
            acc = acc + jnp.where(valid, group, 0.0)

    # 1-channel output: sublane reduce over C_attn, lane-dense (1, L) store.
    out_ref[0] = jnp.sum(acc, axis=0, keepdims=True).astype(out_ref.dtype)


# ----------------------------------------------------------------------------
# Module-equivalent forward
# ----------------------------------------------------------------------------
@functools.partial(jax.jit, static_argnames=("kernel_size",))
def attention_forward(input_tensor, hidden_state, H_w, W_w, V_w, *,
                      kernel_size):
    """
    input_tensor: (B, input_dim, M, N)
    hidden_state: (B, hidden_dim, M, N)
    H_w: (attn_channel, hidden_dim, k, k)
    W_w: (attn_channel, input_dim, k, k)
    V_w: (1, attn_channel, k, k)
    returns energy: (B, 1, M, N)
    """
    assert kernel_size % 2 == 1, "odd kernel_size required for 'same' padding"
    B, C_in, M, N = input_tensor.shape
    C_hid = hidden_state.shape[1]
    C_attn = H_w.shape[0]
    k = kernel_size
    kk = k * k
    p = k // 2
    L = M * N
    C_tot = C_hid + C_in
    # Pad the fused channel axis so each per-tap row band of the im2col
    # operand is an aligned bf16 sublane tile and K = kk*C_pad is a clean
    # multiple of 8/16 (no masked K tail).
    C_pad = ((C_tot + 15) // 16) * 16
    Kfold = kk * C_pad

    # bf16 activations: halves the HBM DMA bytes and is MXU-native everywhere.
    h_flat = hidden_state.reshape(B, C_hid, L).astype(jnp.bfloat16)
    x_flat = input_tensor.reshape(B, C_in, L).astype(jnp.bfloat16)

    # Fold (dy, dx, channel) into one contraction axis with column index
    # (dy*k + dx)*C_pad + c, where c runs over [hidden | input | zero pad].
    w_cat = jnp.concatenate(
        [jnp.transpose(H_w, (0, 2, 3, 1)), jnp.transpose(W_w, (0, 2, 3, 1))],
        axis=-1)                                          # (C_attn, k, k, C_tot)
    w_cat = jnp.pad(w_cat, ((0, 0), (0, 0), (0, 0), (0, C_pad - C_tot)))
    w_cat = w_cat.reshape(C_attn, Kfold).astype(jnp.bfloat16)
    vw = V_w[0].reshape(C_attn, kk).astype(jnp.float32)   # Stage 2 stays f32

    # Flat halo padding: left pad rounded to a lane multiple so the interior
    # store is lane-aligned; pad >= p*N + p covers every tap's flat shift.
    pad_need = p * N + p
    pad_left = ((pad_need + 127) // 128) * 128
    assert pad_left >= pad_need, "halo pad must cover the largest tap shift"
    scratch_w = pad_left + L + pad_left

    kernel = functools.partial(
        _attention_kernel, N=N, L=L, kernel_size=k, pad_left=pad_left,
        C_hid=C_hid, C_in=C_in, C_pad=C_pad)

    flops = B * (2 * C_attn * Kfold * L + 2 * kk * C_attn * L + C_attn * L)
    bytes_accessed = (B * C_tot * L * 2 + C_attn * Kfold * 2
                      + C_attn * kk * 4 + B * L * 4)

    energy = pl.pallas_call(
        kernel,
        out_shape=jax.ShapeDtypeStruct((B, 1, L), jnp.float32),
        grid_spec=pltpu.PrefetchScalarGridSpec(
            num_scalar_prefetch=0,
            grid=(B,),
            in_specs=[
                pl.BlockSpec((1, C_hid, L), lambda b: (b, 0, 0)),  # hidden
                pl.BlockSpec((1, C_in, L), lambda b: (b, 0, 0)),   # input
                pl.BlockSpec((C_attn, Kfold), lambda b: (0, 0)),   # H|W (resident)
                pl.BlockSpec((C_attn, kk), lambda b: (0, 0)),      # V (resident)
            ],
            out_specs=pl.BlockSpec((1, 1, L), lambda b: (b, 0, 0)),
            scratch_shapes=[
                pltpu.VMEM((C_pad, scratch_w), jnp.float32),    # halo'd acts
                pltpu.VMEM((Kfold, L), jnp.bfloat16),           # im2col operand
                pltpu.VMEM((C_attn, scratch_w), jnp.float32),   # halo'd tanh
            ],
        ),
        compiler_params=pltpu.CompilerParams(
            dimension_semantics=("parallel",),
            vmem_limit_bytes=48 * 1024 * 1024,
        ),
        cost_estimate=pl.CostEstimate(
            flops=int(flops),
            transcendentals=int(B * C_attn * L),
            bytes_accessed=int(bytes_accessed),
        ),
    )(h_flat, x_flat, w_cat, vw)

    return energy.reshape(B, 1, M, N)


# ----------------------------------------------------------------------------
# Plain-JAX reference (for correctness check)
# ----------------------------------------------------------------------------
def _conv_ref(x, w):
    return jax.lax.conv_general_dilated(
        x, w, window_strides=(1, 1), padding="SAME",
        dimension_numbers=("NCHW", "OIHW", "NCHW"))


def attention_ref(input_tensor, hidden_state, H_w, W_w, V_w):
    return _conv_ref(jnp.tanh(_conv_ref(hidden_state, H_w) +
                              _conv_ref(input_tensor, W_w)), V_w)


if __name__ == "__main__":
    # Small deterministic problem.
    B = 2
    input_dim = 4
    hidden_dim = 8
    attn_channel = 16
    kernel_size = 3
    M = N = 16

    key = jax.random.PRNGKey(0)
    k_x, k_h, k_Hw, k_Ww, k_Vw = jax.random.split(key, 5)

    input_tensor = jax.random.normal(k_x, (B, input_dim, M, N), jnp.float32)
    hidden_state = jax.random.normal(k_h, (B, hidden_dim, M, N), jnp.float32)

    # Deterministic parameter init (Conv2d weights, bias=False).
    H_w = 0.1 * jax.random.normal(
        k_Hw, (attn_channel, hidden_dim, kernel_size, kernel_size), jnp.float32)
    W_w = 0.1 * jax.random.normal(
        k_Ww, (attn_channel, input_dim, kernel_size, kernel_size), jnp.float32)
    V_w = 0.1 * jax.random.normal(
        k_Vw, (1, attn_channel, kernel_size, kernel_size), jnp.float32)

    energy = attention_forward(input_tensor, hidden_state, H_w, W_w, V_w,
                               kernel_size=kernel_size)
    energy = jax.block_until_ready(energy)

    ref = attention_ref(input_tensor, hidden_state, H_w, W_w, V_w)
    # Tolerance loosened vs. the f32 reference because the Stage-1 matmul
    # operands are bf16 (f32 accumulation; tanh and the V conv stay f32).
    np.testing.assert_allclose(np.asarray(energy), np.asarray(ref),
                               rtol=2e-2, atol=3e-2)
    assert energy.shape == (B, 1, M, N)

    print("KERNEL_OK")
</pallas_src>

<mosaic_0001>
module attributes {stable_mosaic.version = 11 : i64} {
  func.func @_attention_kernel(%arg0: i32, %arg1: memref<1x8x256xbf16, #tpu.memory_space<vmem>>, %arg2: memref<1x4x256xbf16, #tpu.memory_space<vmem>>, %arg3: memref<16x144xbf16, #tpu.memory_space<vmem>>, %arg4: memref<16x9xf32, #tpu.memory_space<vmem>>, %arg5: memref<1x1x256xf32, #tpu.memory_space<vmem>>, %arg6: memref<16x512xf32, #tpu.memory_space<vmem>>, %arg7: memref<144x256xbf16, #tpu.memory_space<vmem>>, %arg8: memref<16x512xf32, #tpu.memory_space<vmem>>) attributes {dimension_semantics = [#tpu.dimension_semantics<parallel>], iteration_bounds = array<i64: 2>, scalar_prefetch = 0 : i64, scratch_operands = 3 : i64, tpu.core_type = #tpu.core_type<tc>, window_params = [{transform_indices = @transform_0, window_bounds = array<i64: 1, 8, 256>}, {transform_indices = @transform_1, window_bounds = array<i64: 1, 4, 256>}, {pipeline_mode = #tpu.pipeline_mode<synchronous>, transform_indices = @transform_2, window_bounds = array<i64: 16, 144>}, {pipeline_mode = #tpu.pipeline_mode<synchronous>, transform_indices = @transform_3, window_bounds = array<i64: 16, 9>}, {transform_indices = @transform_4, window_bounds = array<i64: 1, 1, 256>}]} {
    %cst = arith.constant 0.000000e+00 : f32
    %0 = vector.broadcast %cst : f32 to vector<16x128xf32>
    %c0 = arith.constant 0 : index
    %c0_0 = arith.constant 0 : index
    %1 = vector.load %arg6[%c0, %c0_0] : memref<16x512xf32, #tpu.memory_space<vmem>>, vector<16x128xf32>
    tpu.vector_store %arg6[%c0, %c0_0], %0 {strides = array<i32>} : memref<16x512xf32, #tpu.memory_space<vmem>>, vector<16x128xf32>,
    %cst_1 = arith.constant 0.000000e+00 : f32
    %2 = vector.broadcast %cst_1 : f32 to vector<16x128xf32>
    %c0_2 = arith.constant 0 : index
    %c384 = arith.constant 384 : index
    %3 = vector.load %arg6[%c0_2, %c384] : memref<16x512xf32, #tpu.memory_space<vmem>>, vector<16x128xf32>
    tpu.vector_store %arg6[%c0_2, %c384], %2 {strides = array<i32>} : memref<16x512xf32, #tpu.memory_space<vmem>>, vector<16x128xf32>,
    %cst_3 = arith.constant 0.000000e+00 : f32
    %4 = vector.broadcast %cst_3 : f32 to vector<16x128xf32>
    %c0_4 = arith.constant 0 : index
    %c0_5 = arith.constant 0 : index
    %5 = vector.load %arg8[%c0_4, %c0_5] : memref<16x512xf32, #tpu.memory_space<vmem>>, vector<16x128xf32>
    tpu.vector_store %arg8[%c0_4, %c0_5], %4 {strides = array<i32>} : memref<16x512xf32, #tpu.memory_space<vmem>>, vector<16x128xf32>,
    %cst_6 = arith.constant 0.000000e+00 : f32
    %6 = vector.broadcast %cst_6 : f32 to vector<16x128xf32>
    %c0_7 = arith.constant 0 : index
    %c384_8 = arith.constant 384 : index
    %7 = vector.load %arg8[%c0_7, %c384_8] : memref<16x512xf32, #tpu.memory_space<vmem>>, vector<16x128xf32>
    tpu.vector_store %arg8[%c0_7, %c384_8], %6 {strides = array<i32>} : memref<16x512xf32, #tpu.memory_space<vmem>>, vector<16x128xf32>,
    %cst_9 = arith.constant 0.000000e+00 : f32
    %8 = vector.broadcast %cst_9 : f32 to vector<4x256xf32>
    %c12 = arith.constant 12 : index
    %c128 = arith.constant 128 : index
    %9 = vector.load %arg6[%c12, %c128] : memref<16x512xf32, #tpu.memory_space<vmem>>, vector<4x256xf32>
    tpu.vector_store %arg6[%c12, %c128], %8 {strides = array<i32>} : memref<16x512xf32, #tpu.memory_space<vmem>>, vector<4x256xf32>,
    %c0_10 = arith.constant 0 : index
    %c0_11 = arith.constant 0 : index
    %c0_12 = arith.constant 0 : index
    %10 = vector.load %arg1[%c0_10, %c0_11, %c0_12] : memref<1x8x256xbf16, #tpu.memory_space<vmem>>, vector<1x8x256xbf16>
    %11 = vector.shape_cast %10 : vector<1x8x256xbf16> to vector<8x256xbf16>
    %12 = arith.extf %11 : vector<8x256xbf16> to vector<8x256xf32>
    %c0_13 = arith.constant 0 : index
    %c128_14 = arith.constant 128 : index
    %13 = vector.load %arg6[%c0_13, %c128_14] : memref<16x512xf32, #tpu.memory_space<vmem>>, vector<8x256xf32>
    tpu.vector_store %arg6[%c0_13, %c128_14], %12 {strides = array<i32>} : memref<16x512xf32, #tpu.memory_space<vmem>>, vector<8x256xf32>,
    %c0_15 = arith.constant 0 : index
    %c0_16 = arith.constant 0 : index
    %c0_17 = arith.constant 0 : index
    %14 = vector.load %arg2[%c0_15, %c0_16, %c0_17] : memref<1x4x256xbf16, #tpu.memory_space<vmem>>, vector<1x4x256xbf16>
    %15 = vector.shape_cast %14 : vector<1x4x256xbf16> to vector<4x256xbf16>
    %16 = arith.extf %15 : vector<4x256xbf16> to vector<4x256xf32>
    %c8 = arith.constant 8 : index
    %c128_18 = arith.constant 128 : index
    %17 = vector.load %arg6[%c8, %c128_18] : memref<16x512xf32, #tpu.memory_space<vmem>>, vector<4x256xf32>
    tpu.vector_store %arg6[%c8, %c128_18], %16 {strides = array<i32>} : memref<16x512xf32, #tpu.memory_space<vmem>>, vector<4x256xf32>,
    %18 = tpu.iota {dimensions = array<i32: 1>} : vector<16x256xi32>
    %c16_i32 = arith.constant 16 : i32
    %c0_i32 = arith.constant 0 : i32
    %19 = arith.cmpi eq, %c16_i32, %c0_i32 : i32
    %c1_i32 = arith.constant 1 : i32
    %20 = arith.select %19, %c1_i32, %c16_i32 : i32
    %21 = vector.broadcast %20 : i32 to vector<16x256xi32>
    %22 = arith.remsi %18, %21 : vector<16x256xi32>
    %c0_i32_19 = arith.constant 0 : i32
    %23 = vector.broadcast %c0_i32_19 : i32 to vector<16x256xi32>
    %24 = arith.cmpi ne, %22, %23 : vector<16x256xi32>
    %c0_i32_20 = arith.constant 0 : i32
    %25 = vector.broadcast %c0_i32_20 : i32 to vector<16x256xi32>
    %26 = arith.cmpi slt, %22, %25 : vector<16x256xi32>
    %c0_i32_21 = arith.constant 0 : i32
    %27 = arith.cmpi slt, %20, %c0_i32_21 : i32
    %28 = vector.broadcast %27 : i1 to vector<16x256xi1>
    %29 = vector.broadcast %28 : vector<16x256xi1> to vector<16x256xi1>
    %30 = arith.xori %26, %29 : vector<16x256xi1>
    %31 = arith.andi %30, %24 : vector<16x256xi1>
    %32 = vector.broadcast %20 : i32 to vector<16x256xi32>
    %33 = arith.addi %22, %32 : vector<16x256xi32>
    %34 = arith.select %31, %33, %22 : vector<16x256xi1>, vector<16x256xi32>
    %c1_i32_22 = arith.constant 1 : i32
    %35 = vector.broadcast %c1_i32_22 : i32 to vector<16x256xi32>
    %36 = arith.cmpi sge, %34, %35 : vector<16x256xi32>
    %c17_i32 = arith.constant 17 : i32
    %37 = vector.broadcast %c17_i32 : i32 to vector<16x256xi32>
    %38 = arith.cmpi slt, %34, %37 : vector<16x256xi32>
    %39 = arith.andi %36, %38 : vector<16x256xi1>
    %c0_23 = arith.constant 0 : index
    %c111 = arith.constant 111 : index
    %40 = vector.load %arg6[%c0_23, %c111] : memref<16x512xf32, #tpu.memory_space<vmem>>, vector<16x256xf32>
    %cst_24 = arith.constant 0.000000e+00 : f32
    %41 = vector.broadcast %cst_24 : f32 to vector<16x256xf32>
    %42 = arith.select %39, %40, %41 : vector<16x256xi1>, vector<16x256xf32>
    %43 = arith.truncf %42 : vector<16x256xf32> to vector<16x256xbf16>
    %c0_25 = arith.constant 0 : index
    %c0_26 = arith.constant 0 : index
    %44 = vector.load %arg7[%c0_25, %c0_26] : memref<144x256xbf16, #tpu.memory_space<vmem>>, vector<16x256xbf16>
    tpu.vector_store %arg7[%c0_25, %c0_26], %43 {strides = array<i32>} : memref<144x256xbf16, #tpu.memory_space<vmem>>, vector<16x256xbf16>,
    %c0_27 = arith.constant 0 : index
    %c127 = arith.constant 127 : index
    %45 = vector.load %arg6[%c0_27, %c127] : memref<16x512xf32, #tpu.memory_space<vmem>>, vector<16x256xf32>
    %cst_28 = arith.constant 0.000000e+00 : f32
    %46 = vector.broadcast %cst_28 : f32 to vector<16x256xf32>
    %47 = arith.select %39, %45, %46 : vector<16x256xi1>, vector<16x256xf32>
    %48 = arith.truncf %47 : vector<16x256xf32> to vector<16x256xbf16>
    %c48 = arith.constant 48 : index
    %c0_29 = arith.constant 0 : index
    %49 = vector.load %arg7[%c48, %c0_29] : memref<144x256xbf16, #tpu.memory_space<vmem>>, vector<16x256xbf16>
    tpu.vector_store %arg7[%c48, %c0_29], %48 {strides = array<i32>} : memref<144x256xbf16, #tpu.memory_space<vmem>>, vector<16x256xbf16>,
    %c0_30 = arith.constant 0 : index
    %c143 = arith.constant 143 : index
    %50 = vector.load %arg6[%c0_30, %c143] : memref<16x512xf32, #tpu.memory_space<vmem>>, vector<16x256xf32>
    %cst_31 = arith.constant 0.000000e+00 : f32
    %51 = vector.broadcast %cst_31 : f32 to vector<16x256xf32>
    %52 = arith.select %39, %50, %51 : vector<16x256xi1>, vector<16x256xf32>
    %53 = arith.truncf %52 : vector<16x256xf32> to vector<16x256xbf16>
    %c96 = arith.constant 96 : index
    %c0_32 = arith.constant 0 : index
    %54 = vector.load %arg7[%c96, %c0_32] : memref<144x256xbf16, #tpu.memory_space<vmem>>, vector<16x256xbf16>
    tpu.vector_store %arg7[%c96, %c0_32], %53 {strides = array<i32>} : memref<144x256xbf16, #tpu.memory_space<vmem>>, vector<16x256xbf16>,
    %c0_33 = arith.constant 0 : index
    %c112 = arith.constant 112 : index
    %55 = vector.load %arg6[%c0_33, %c112] : memref<16x512xf32, #tpu.memory_space<vmem>>, vector<16x256xf32>
    %56 = arith.truncf %55 : vector<16x256xf32> to vector<16x256xbf16>
    %c16 = arith.constant 16 : index
    %c0_34 = arith.constant 0 : index
    %57 = vector.load %arg7[%c16, %c0_34] : memref<144x256xbf16, #tpu.memory_space<vmem>>, vector<16x256xbf16>
    tpu.vector_store %arg7[%c16, %c0_34], %56 {strides = array<i32>} : memref<144x256xbf16, #tpu.memory_space<vmem>>, vector<16x256xbf16>,
    %c0_35 = arith.constant 0 : index
    %c128_36 = arith.constant 128 : index
    %58 = vector.load %arg6[%c0_35, %c128_36] : memref<16x512xf32, #tpu.memory_space<vmem>>, vector<16x256xf32>
    %59 = arith.truncf %58 : vector<16x256xf32> to vector<16x256xbf16>
    %c64 = arith.constant 64 : index
    %c0_37 = arith.constant 0 : index
    %60 = vector.load %arg7[%c64, %c0_37] : memref<144x256xbf16, #tpu.memory_space<vmem>>, vector<16x256xbf16>
    tpu.vector_store %arg7[%c64, %c0_37], %59 {strides = array<i32>} : memref<144x256xbf16, #tpu.memory_space<vmem>>, vector<16x256xbf16>,
    %c0_38 = arith.constant 0 : index
    %c144 = arith.constant 144 : index
    %61 = vector.load %arg6[%c0_38, %c144] : memref<16x512xf32, #tpu.memory_space<vmem>>, vector<16x256xf32>
    %62 = arith.truncf %61 : vector<16x256xf32> to vector<16x256xbf16>
    %c112_39 = arith.constant 112 : index
    %c0_40 = arith.constant 0 : index
    %63 = vector.load %arg7[%c112_39, %c0_40] : memref<144x256xbf16, #tpu.memory_space<vmem>>, vector<16x256xbf16>
    tpu.vector_store %arg7[%c112_39, %c0_40], %62 {strides = array<i32>} : memref<144x256xbf16, #tpu.memory_space<vmem>>, vector<16x256xbf16>,
    %c-1_i32 = arith.constant -1 : i32
    %64 = vector.broadcast %c-1_i32 : i32 to vector<16x256xi32>
    %65 = arith.cmpi sge, %34, %64 : vector<16x256xi32>
    %c15_i32 = arith.constant 15 : i32
    %66 = vector.broadcast %c15_i32 : i32 to vector<16x256xi32>
    %67 = arith.cmpi slt, %34, %66 : vector<16x256xi32>
    %68 = arith.andi %65, %67 : vector<16x256xi1>
    %c0_41 = arith.constant 0 : index
    %c113 = arith.constant 113 : index
    %69 = vector.load %arg6[%c0_41, %c113] : memref<16x512xf32, #tpu.memory_space<vmem>>, vector<16x256xf32>
    %cst_42 = arith.constant 0.000000e+00 : f32
    %70 = vector.broadcast %cst_42 : f32 to vector<16x256xf32>
    %71 = arith.select %68, %69, %70 : vector<16x256xi1>, vector<16x256xf32>
    %72 = arith.truncf %71 : vector<16x256xf32> to vector<16x256xbf16>
    %c32 = arith.constant 32 : index
    %c0_43 = arith.constant 0 : index
    %73 = vector.load %arg7[%c32, %c0_43] : memref<144x256xbf16, #tpu.memory_space<vmem>>, vector<16x256xbf16>
    tpu.vector_store %arg7[%c32, %c0_43], %72 {strides = array<i32>} : memref<144x256xbf16, #tpu.memory_space<vmem>>, vector<16x256xbf16>,
    %c0_44 = arith.constant 0 : index
    %c129 = arith.constant 129 : index
    %74 = vector.load %arg6[%c0_44, %c129] : memref<16x512xf32, #tpu.memory_space<vmem>>, vector<16x256xf32>
    %cst_45 = arith.constant 0.000000e+00 : f32
    %75 = vector.broadcast %cst_45 : f32 to vector<16x256xf32>
    %76 = arith.select %68, %74, %75 : vector<16x256xi1>, vector<16x256xf32>
    %77 = arith.truncf %76 : vector<16x256xf32> to vector<16x256xbf16>
    %c80 = arith.constant 80 : index
    %c0_46 = arith.constant 0 : index
    %78 = vector.load %arg7[%c80, %c0_46] : memref<144x256xbf16, #tpu.memory_space<vmem>>, vector<16x256xbf16>
    tpu.vector_store %arg7[%c80, %c0_46], %77 {strides = array<i32>} : memref<144x256xbf16, #tpu.memory_space<vmem>>, vector<16x256xbf16>,
    %c0_47 = arith.constant 0 : index
    %c145 = arith.constant 145 : index
    %79 = vector.load %arg6[%c0_47, %c145] : memref<16x512xf32, #tpu.memory_space<vmem>>, vector<16x256xf32>
    %cst_48 = arith.constant 0.000000e+00 : f32
    %80 = vector.broadcast %cst_48 : f32 to vector<16x256xf32>
    %81 = arith.select %68, %79, %80 : vector<16x256xi1>, vector<16x256xf32>
    %82 = arith.truncf %81 : vector<16x256xf32> to vector<16x256xbf16>
    %c128_49 = arith.constant 128 : index
    %c0_50 = arith.constant 0 : index
    %83 = vector.load %arg7[%c128_49, %c0_50] : memref<144x256xbf16, #tpu.memory_space<vmem>>, vector<16x256xbf16>
    tpu.vector_store %arg7[%c128_49, %c0_50], %82 {strides = array<i32>} : memref<144x256xbf16, #tpu.memory_space<vmem>>, vector<16x256xbf16>,
    %c0_51 = arith.constant 0 : index
    %c0_52 = arith.constant 0 : index
    %84 = vector.load %arg3[%c0_51, %c0_52] : memref<16x144xbf16, #tpu.memory_space<vmem>>, vector<16x144xbf16>
    %c0_53 = arith.constant 0 : index
    %c0_54 = arith.constant 0 : index
    %85 = vector.load %arg7[%c0_53, %c0_54] : memref<144x256xbf16, #tpu.memory_space<vmem>>, vector<144x256xbf16>
    %cst_55 = arith.constant dense<0.000000e+00> : vector<16x256xf32>
    %86 = tpu.matmul %84, %85, %cst_55 {dimension_numbers = #tpu.dot_dimension_numbers<[1], [0], [0], [1], [0, 0, 1, 1], [], []>} : vector<16x144xbf16>, vector<144x256xbf16>, vector<16x256xf32> -> vector<16x256xf32>
    %87 = math.tanh %86 : vector<16x256xf32>
    %c0_56 = arith.constant 0 : index
    %c128_57 = arith.constant 128 : index
    %88 = vector.load %arg8[%c0_56, %c128_57] : memref<16x512xf32, #tpu.memory_space<vmem>>, vector<16x256xf32>
    tpu.vector_store %arg8[%c0_56, %c128_57], %87 {strides = array<i32>} : memref<16x512xf32, #tpu.memory_space<vmem>>, vector<16x256xf32>,
    %89 = tpu.iota {dimensions = array<i32: 1>} : vector<16x256xi32>
    %c16_i32_58 = arith.constant 16 : i32
    %c0_i32_59 = arith.constant 0 : i32
    %90 = arith.cmpi eq, %c16_i32_58, %c0_i32_59 : i32
    %c1_i32_60 = arith.constant 1 : i32
    %91 = arith.select %90, %c1_i32_60, %c16_i32_58 : i32
    %92 = vector.broadcast %91 : i32 to vector<16x256xi32>
    %93 = arith.remsi %89, %92 : vector<16x256xi32>
    %c0_i32_61 = arith.constant 0 : i32
    %94 = vector.broadcast %c0_i32_61 : i32 to vector<16x256xi32>
    %95 = arith.cmpi ne, %93, %94 : vector<16x256xi32>
    %c0_i32_62 = arith.constant 0 : i32
    %96 = vector.broadcast %c0_i32_62 : i32 to vector<16x256xi32>
    %97 = arith.cmpi slt, %93, %96 : vector<16x256xi32>
    %c0_i32_63 = arith.constant 0 : i32
    %98 = arith.cmpi slt, %91, %c0_i32_63 : i32
    %99 = vector.broadcast %98 : i1 to vector<16x256xi1>
    %100 = vector.broadcast %99 : vector<16x256xi1> to vector<16x256xi1>
    %101 = arith.xori %97, %100 : vector<16x256xi1>
    %102 = arith.andi %101, %95 : vector<16x256xi1>
    %103 = vector.broadcast %91 : i32 to vector<16x256xi32>
    %104 = arith.addi %93, %103 : vector<16x256xi32>
    %105 = arith.select %102, %104, %93 : vector<16x256xi1>, vector<16x256xi32>
    %c0_64 = arith.constant 0 : index
    %c4 = arith.constant 4 : index
    %106 = vector.load %arg4[%c0_64, %c4] : memref<16x9xf32, #tpu.memory_space<vmem>>, vector<16x1xf32>
    %107 = vector.broadcast %106 : vector<16x1xf32> to vector<16x256xf32>
    %108 = arith.mulf %87, %107 : vector<16x256xf32>
    %c0_65 = arith.constant 0 : index
    %c111_66 = arith.constant 111 : index
    %109 = vector.load %arg8[%c0_65, %c111_66] : memref<16x512xf32, #tpu.memory_space<vmem>>, vector<16x256xf32>
    %c0_67 = arith.constant 0 : index
    %c0_68 = arith.constant 0 : index
    %110 = vector.load %arg4[%c0_67, %c0_68] : memref<16x9xf32, #tpu.memory_space<vmem>>, vector<16x1xf32>
    %111 = vector.broadcast %110 : vector<16x1xf32> to vector<16x256xf32>
    %112 = arith.mulf %109, %111 : vector<16x256xf32>
    %c0_69 = arith.constant 0 : index
    %c127_70 = arith.constant 127 : index
    %113 = vector.load %arg8[%c0_69, %c127_70] : memref<16x512xf32, #tpu.memory_space<vmem>>, vector<16x256xf32>
    %c0_71 = arith.constant 0 : index
    %c3 = arith.constant 3 : index
    %114 = vector.load %arg4[%c0_71, %c3] : memref<16x9xf32, #tpu.memory_space<vmem>>, vector<16x1xf32>
    %115 = vector.broadcast %114 : vector<16x1xf32> to vector<16x256xf32>
    %116 = arith.mulf %113, %115 : vector<16x256xf32>
    %117 = arith.addf %112, %116 : vector<16x256xf32>
    %c0_72 = arith.constant 0 : index
    %c143_73 = arith.constant 143 : index
    %118 = vector.load %arg8[%c0_72, %c143_73] : memref<16x512xf32, #tpu.memory_space<vmem>>, vector<16x256xf32>
    %c0_74 = arith.constant 0 : index
    %c6 = arith.constant 6 : index
    %119 = vector.load %arg4[%c0_74, %c6] : memref<16x9xf32, #tpu.memory_space<vmem>>, vector<16x1xf32>
    %120 = vector.broadcast %119 : vector<16x1xf32> to vector<16x256xf32>
    %121 = arith.mulf %118, %120 : vector<16x256xf32>
    %122 = arith.addf %117, %121 : vector<16x256xf32>
    %c1_i32_75 = arith.constant 1 : i32
    %123 = vector.broadcast %c1_i32_75 : i32 to vector<16x256xi32>
    %124 = arith.cmpi sge, %105, %123 : vector<16x256xi32>
    %c17_i32_76 = arith.constant 17 : i32
    %125 = vector.broadcast %c17_i32_76 : i32 to vector<16x256xi32>
    %126 = arith.cmpi slt, %105, %125 : vector<16x256xi32>
    %127 = arith.andi %124, %126 : vector<16x256xi1>
    %cst_77 = arith.constant 0.000000e+00 : f32
    %128 = vector.broadcast %cst_77 : f32 to vector<16x256xf32>
    %129 = arith.select %127, %122, %128 : vector<16x256xi1>, vector<16x256xf32>
    %130 = arith.addf %108, %129 : vector<16x256xf32>
    %c0_78 = arith.constant 0 : index
    %c112_79 = arith.constant 112 : index
    %131 = vector.load %arg8[%c0_78, %c112_79] : memref<16x512xf32, #tpu.memory_space<vmem>>, vector<16x256xf32>
    %c0_80 = arith.constant 0 : index
    %c1 = arith.constant 1 : index
    %132 = vector.load %arg4[%c0_80, %c1] : memref<16x9xf32, #tpu.memory_space<vmem>>, vector<16x1xf32>
    %133 = vector.broadcast %132 : vector<16x1xf32> to vector<16x256xf32>
    %134 = arith.mulf %131, %133 : vector<16x256xf32>
    %c0_81 = arith.constant 0 : index
    %c144_82 = arith.constant 144 : index
    %135 = vector.load %arg8[%c0_81, %c144_82] : memref<16x512xf32, #tpu.memory_space<vmem>>, vector<16x256xf32>
    %c0_83 = arith.constant 0 : index
    %c7 = arith.constant 7 : index
    %136 = vector.load %arg4[%c0_83, %c7] : memref<16x9xf32, #tpu.memory_space<vmem>>, vector<16x1xf32>
    %137 = vector.broadcast %136 : vector<16x1xf32> to vector<16x256xf32>
    %138 = arith.mulf %135, %137 : vector<16x256xf32>
    %139 = arith.addf %134, %138 : vector<16x256xf32>
    %140 = arith.addf %130, %139 : vector<16x256xf32>
    %c0_84 = arith.constant 0 : index
    %c113_85 = arith.constant 113 : index
    %141 = vector.load %arg8[%c0_84, %c113_85] : memref<16x512xf32, #tpu.memory_space<vmem>>, vector<16x256xf32>
    %c0_86 = arith.constant 0 : index
    %c2 = arith.constant 2 : index
    %142 = vector.load %arg4[%c0_86, %c2] : memref<16x9xf32, #tpu.memory_space<vmem>>, vector<16x1xf32>
    %143 = vector.broadcast %142 : vector<16x1xf32> to vector<16x256xf32>
    %144 = arith.mulf %141, %143 : vector<16x256xf32>
    %c0_87 = arith.constant 0 : index
    %c129_88 = arith.constant 129 : index
    %145 = vector.load %arg8[%c0_87, %c129_88] : memref<16x512xf32, #tpu.memory_space<vmem>>, vector<16x256xf32>
    %c0_89 = arith.constant 0 : index
    %c5 = arith.constant 5 : index
    %146 = vector.load %arg4[%c0_89, %c5] : memref<16x9xf32, #tpu.memory_space<vmem>>, vector<16x1xf32>
    %147 = vector.broadcast %146 : vector<16x1xf32> to vector<16x256xf32>
    %148 = arith.mulf %145, %147 : vector<16x256xf32>
    %149 = arith.addf %144, %148 : vector<16x256xf32>
    %c0_90 = arith.constant 0 : index
    %c145_91 = arith.constant 145 : index
    %150 = vector.load %arg8[%c0_90, %c145_91] : memref<16x512xf32, #tpu.memory_space<vmem>>, vector<16x256xf32>
    %c0_92 = arith.constant 0 : index
    %c8_93 = arith.constant 8 : index
    %151 = vector.load %arg4[%c0_92, %c8_93] : memref<16x9xf32, #tpu.memory_space<vmem>>, vector<16x1xf32>
    %152 = vector.broadcast %151 : vector<16x1xf32> to vector<16x256xf32>
    %153 = arith.mulf %150, %152 : vector<16x256xf32>
    %154 = arith.addf %149, %153 : vector<16x256xf32>
    %c-1_i32_94 = arith.constant -1 : i32
    %155 = vector.broadcast %c-1_i32_94 : i32 to vector<16x256xi32>
    %156 = arith.cmpi sge, %105, %155 : vector<16x256xi32>
    %c15_i32_95 = arith.constant 15 : i32
    %157 = vector.broadcast %c15_i32_95 : i32 to vector<16x256xi32>
    %158 = arith.cmpi slt, %105, %157 : vector<16x256xi32>
    %159 = arith.andi %156, %158 : vector<16x256xi1>
    %cst_96 = arith.constant 0.000000e+00 : f32
    %160 = vector.broadcast %cst_96 : f32 to vector<16x256xf32>
    %161 = arith.select %159, %154, %160 : vector<16x256xi1>, vector<16x256xf32>
    %162 = arith.addf %140, %161 : vector<16x256xf32>
    %cst_97 = arith.constant dense<0.000000e+00> : vector<256xf32>
    %163 = vector.multi_reduction <add>, %162, %cst_97 [0] : vector<16x256xf32> to vector<256xf32>
    %164 = vector.shape_cast %163 : vector<256xf32> to vector<1x256xf32>
    %c0_98 = arith.constant 0 : index
    %c0_99 = arith.constant 0 : index
    %c0_100 = arith.constant 0 : index
    %165 = vector.load %arg5[%c0_98, %c0_99, %c0_100] : memref<1x1x256xf32, #tpu.memory_space<vmem>>, vector<1x1x256xf32>
    %166 = vector.shape_cast %165 : vector<1x1x256xf32> to vector<1x256xf32>
    %167 = vector.shape_cast %164 : vector<1x256xf32> to vector<1x1x256xf32>
    tpu.vector_store %arg5[%c0_98, %c0_99, %c0_100], %167 {strides = array<i32>} : memref<1x1x256xf32, #tpu.memory_space<vmem>>, vector<1x1x256xf32>,
    return
  }
  func.func @transform_0(%arg0: i32) -> (i32, i32, i32) {
    %c0_i32 = arith.constant 0 : i32
    %c0_i32_0 = arith.constant 0 : i32
    %c0_i32_1 = arith.constant 0 : i32
    return %arg0, %c0_i32, %c0_i32_0 : i32, i32, i32
  }
  func.func @transform_1(%arg0: i32) -> (i32, i32, i32) {
    %c0_i32 = arith.constant 0 : i32
    %c0_i32_0 = arith.constant 0 : i32
    %c0_i32_1 = arith.constant 0 : i32
    return %arg0, %c0_i32, %c0_i32_0 : i32, i32, i32
  }
  func.func @transform_2(%arg0: i32) -> (i32, i32) {
    %c0_i32 = arith.constant 0 : i32
    %c0_i32_0 = arith.constant 0 : i32
    %c0_i32_1 = arith.constant 0 : i32
    return %c0_i32, %c0_i32_0 : i32, i32
  }
  func.func @transform_3(%arg0: i32) -> (i32, i32) {
    %c0_i32 = arith.constant 0 : i32
    %c0_i32_0 = arith.constant 0 : i32
    %c0_i32_1 = arith.constant 0 : i32
    return %c0_i32, %c0_i32_0 : i32, i32
  }
  func.func @transform_4(%arg0: i32) -> (i32, i32, i32) {
    %c0_i32 = arith.constant 0 : i32
    %c0_i32_0 = arith.constant 0 : i32
    %c0_i32_1 = arith.constant 0 : i32
    return %arg0, %c0_i32, %c0_i32_0 : i32, i32, i32
  }
}

</mosaic_0001>

<llo_original>
// kernel: squeeze.1
$region0: #{squeeze.1}
  %s0 = inlined_call_operand.vmem [shape: f32[16,3,3], index: 0, kind: input, shape index: {}]
  %s1 = inlined_call_operand.vmem [shape: f32[16,9], index: 1, kind: output, shape index: {}]
  $region1: #{squeeze.1} parent=0
    #allocation0 [shape = 'u8[12288]{0}', space=vmem, size = 0x3000, scoped, tag = 'scoped mem for input reshape']
    %s3 = sshllo.u32 0, 4
    %s4 = smul.addr 4, 2
    %s5 = scalar_lea.vmem %s0, %s4
    %v6 = vld [vmem:[%s5] sm:%s3]
    %s7 = scalar_lea.vmem [#allocation0], 16
    %8 = vst [vmem:[%s7] sm:%s3] %v6
    %s9 = scalar_lea.vmem %s0, 4
    %v10 = vld [vmem:[%s9] sm:%s3]
    %s11 = scalar_lea.vmem [#allocation0], 8
    %12 = vst [vmem:[%s11] sm:%s3] %v10
    %v13 = vld [vmem:[%s0] sm:%s3]
    %14 = vst [vmem:[#allocation0] sm:%s3] %v13
    %v15 = vld [vmem:[#allocation0] sm:$0x7]
    %vm16 = vcmask 130048
    %17 = vst.msk [vmem:[%s1] sm:$0x7] %vm16, %v15
    %s18 = scalar_lea.vmem [#allocation0], 8
    %v19 = vld [vmem:[%s18] sm:$0x7]
    %vm20 = vcmask 130048
    %s21 = scalar_lea.vmem %s1, 3
    %22 = vst.msk [vmem:[%s21] sm:$0x7] %vm20, %v19
    %s23 = scalar_lea.vmem [#allocation0], 16
    %v24 = vld [vmem:[%s23] sm:$0x7]
    %vm25 = vcmask 130048
    %s26 = scalar_lea.vmem %s1, 6
    %27 = vst.msk [vmem:[%s26] sm:$0x7] %vm25, %v24

// kernel: attention_forward.1
$region0: #{attention_forward.1}
  #allocation0 [shape = 'u32[]', space=smem, size = 0x4, offset = 0x4, fixed_abs, tag = 'smem constant byte address 0x4 - core index']
  #allocation1 [shape = 'u32[144,128]{1,0:T(1,128)}', space=vmem, size = 0x12000, scoped, tag = 'internal scratch']
  #allocation2 [shape = 'f32[16,512]{1,0:T(8,128)}', space=vmem, size = 0x8000, scoped, tag = 'scratch operand']
  #allocation3 [shape = 'bf16[144,256]{1,0:T(16,128)(2,1)}', space=vmem, size = 0x12000, scoped, tag = 'scratch operand']
  #allocation4 [shape = 'f32[16,512]{1,0:T(8,128)}', space=vmem, size = 0x8000, scoped, tag = 'scratch operand']
  %s0 = inlined_call_operand.vmem [shape: bf16[2,8,256], index: 0, kind: input, shape index: {}]
  %s1 = inlined_call_operand.vmem [shape: bf16[2,4,256], index: 1, kind: input, shape index: {}]
  %s2 = inlined_call_operand.vmem [shape: bf16[16,144], index: 2, kind: input, shape index: {}]
  %s3 = inlined_call_operand.vmem [shape: f32[16,9], index: 3, kind: input, shape index: {}]
  %s4 = inlined_call_operand.vmem [shape: f32[2,1,256], index: 4, kind: output, shape index: {}]
  %s5 = sld [smem:[#allocation0]]
  $region49: #{attention_forward.1} parent=0
    _
  %s7 = ssub.s32 1, %s5
  %s8 = scalar_select 0, %s7, %s5
  loop: start=0, step=1, limit=4
  $region2: #{attention_forward.1} parent=0 // loop_pre_header
    _
  $region3: #{attention_forward.1} parent=0 // loop_header
    %s10 = sphi 0, %s14
    %p11 = scmp.ge.s32.totalorder %s10, 4
    %s20 = sphi 0, %s22
    %s23 = sphi 0, %s20
    %s24 = sphi 0, %s23
    %s40 = sphi 0, %s24
    %s46 = sphi 0, %s48
    %s49 = sphi 0, %s46
    %s50 = sphi 0, %s49
    %s66 = sphi 0, %s50
    %s70 = sphi 0, %s70
    %s72 = sphi 0, %s70
    %s73 = sphi 0, %s72
    %s87 = sphi 0, %s73
    %s91 = sphi 0, %s91
    %s93 = sphi 0, %s91
    %s94 = sphi 0, %s93
    %s108 = sphi 0, %s94
    %s114 = sphi 0, %s116
    %s117 = sphi 0, %s114
    %s118 = sphi 0, %s117
    %s134 = sphi 0, %s118
  $region4: #{attention_forward.1} parent=0 // loop_header_branch
    %13 = sbr.rel (%p11) target = $region8
  $region5: #{attention_forward.1} parent=0 // loop_body
    %s15 = ssub.s32 %s10, 1
    %s16 = ssub.s32 %s10, 2
    %s17 = sadd.s32 %s10, 1
    %s18 = ssub.s32 %s10, %s17
    %p19 = scmp.eq.s32.totalorder %s18, 0
    %s21 = sadd.s32 %s20, 1
    %s22 = scalar_select %p19, %s20, %s21
    %p25 = pneg %p19
    %p26 = scmp.eq.s32.totalorder %s10, 1
    %p27 = por %p25, %p26
    %p28 = scmp.ne.s32.totalorder %s20, %s23
    %p29 = scmp.eq.s32.totalorder %s10, 0
    %p30 = por %p28, %p29
    %p31 = scmp.ne.s32.totalorder %s20, %s23
    %p32 = scmp.eq.s32.totalorder %s15, 1
    %p33 = por %p31, %p32
    %p34 = scmp.ne.s32.totalorder %s23, %s24
    %p35 = scmp.eq.s32.totalorder %s15, 0
    %p36 = por %p34, %p35
    %p37 = scmp.ne.s32.totalorder %s23, %s24
    %p38 = scmp.eq.s32.totalorder %s16, 1
    %p39 = por %p37, %p38
    %p41 = scmp.ne.s32.totalorder %s24, %s40
    %p42 = scmp.eq.s32.totalorder %s16, 0
    %p43 = por %p41, %p42
    %s44 = ssub.s32 %s10, %s17
    %p45 = scmp.eq.s32.totalorder %s44, 0
    %s47 = sadd.s32 %s46, 1
    %s48 = scalar_select %p45, %s46, %s47
    %p51 = pneg %p45
    %p52 = scmp.eq.s32.totalorder %s10, 1
    %p53 = por %p51, %p52
    %p54 = scmp.ne.s32.totalorder %s46, %s49
    %p55 = scmp.eq.s32.totalorder %s10, 0
    %p56 = por %p54, %p55
    %p57 = scmp.ne.s32.totalorder %s46, %s49
    %p58 = scmp.eq.s32.totalorder %s15, 1
    %p59 = por %p57, %p58
    %p60 = scmp.ne.s32.totalorder %s49, %s50
    %p61 = scmp.eq.s32.totalorder %s15, 0
    %p62 = por %p60, %p61
    %p63 = scmp.ne.s32.totalorder %s49, %s50
    %p64 = scmp.eq.s32.totalorder %s16, 1
    %p65 = por %p63, %p64
    %p67 = scmp.ne.s32.totalorder %s50, %s66
    %p68 = scmp.eq.s32.totalorder %s16, 0
    %p69 = por %p67, %p68
    %s71 = sadd.s32 %s70, 1
    %p74 = scmp.eq.s32.totalorder %s10, 1
    %p75 = scmp.ne.s32.totalorder %s70, %s72
    %p76 = scmp.eq.s32.totalorder %s10, 0
    %p77 = por %p75, %p76
    %p78 = scmp.ne.s32.totalorder %s70, %s72
    %p79 = scmp.eq.s32.totalorder %s15, 1
    %p80 = por %p78, %p79
    %p81 = scmp.ne.s32.totalorder %s72, %s73
    %p82 = scmp.eq.s32.totalorder %s15, 0
    %p83 = por %p81, %p82
    %p84 = scmp.ne.s32.totalorder %s72, %s73
    %p85 = scmp.eq.s32.totalorder %s16, 1
    %p86 = por %p84, %p85
    %p88 = scmp.ne.s32.totalorder %s73, %s87
    %p89 = scmp.eq.s32.totalorder %s16, 0
    %p90 = por %p88, %p89
    %s92 = sadd.s32 %s91, 1
    %p95 = scmp.eq.s32.totalorder %s10, 1
    %p96 = scmp.ne.s32.totalorder %s91, %s93
    %p97 = scmp.eq.s32.totalorder %s10, 0
    %p98 = por %p96, %p97
    %p99 = scmp.ne.s32.totalorder %s91, %s93
    %p100 = scmp.eq.s32.totalorder %s15, 1
    %p101 = por %p99, %p100
    %p102 = scmp.ne.s32.totalorder %s93, %s94
    %p103 = scmp.eq.s32.totalorder %s15, 0
    %p104 = por %p102, %p103
    %p105 = scmp.ne.s32.totalorder %s93, %s94
    %p106 = scmp.eq.s32.totalorder %s16, 1
    %p107 = por %p105, %p106
    %p109 = scmp.ne.s32.totalorder %s94, %s108
    %p110 = scmp.eq.s32.totalorder %s16, 0
    %p111 = por %p109, %p110
    %s112 = ssub.s32 %s10, %s17
    %p113 = scmp.eq.s32.totalorder %s112, 0
    %s115 = sadd.s32 %s114, 1
    %s116 = scalar_select %p113, %s114, %s115
    %p119 = pneg %p113
    %p120 = scmp.eq.s32.totalorder %s10, 1
    %p121 = por %p119, %p120
    %p122 = scmp.ne.s32.totalorder %s114, %s117
    %p123 = scmp.eq.s32.totalorder %s10, 0
    %p124 = por %p122, %p123
    %p125 = scmp.ne.s32.totalorder %s114, %s117
    %p126 = scmp.eq.s32.totalorder %s15, 1
    %p127 = por %p125, %p126
    %p128 = scmp.ne.s32.totalorder %s117, %s118
    %p129 = scmp.eq.s32.totalorder %s15, 0
    %p130 = por %p128, %p129
    %p131 = scmp.ne.s32.totalorder %s117, %s118
    %p132 = scmp.eq.s32.totalorder %s16, 1
    %p133 = por %p131, %p132
    %p135 = scmp.ne.s32.totalorder %s118, %s134
    %p136 = scmp.eq.s32.totalorder %s16, 0
    %p137 = por %p135, %p136
    %p138 = scmp.le.s32.totalorder 1, %s10
    %p139 = scmp.lt.s32.totalorder %s10, 3
    %p140 = pnand %p138, %p139
    %p141 = pneg %p140
    // Predicated region
    $region9: #{attention_forward.1} parent=5 // pred_check
      _
    $region10: #{attention_forward.1} parent=5 // pred_check_branch
      %143 = sbr.rel (%p140) target = $region12
    $region11: #{attention_forward.1} parent=5 // pred_region
      %s144 = ssub.s32 %s10, 1
      // Predicated region
      $region13: #{attention_forward.1} parent=11 // pred_check
        %p145 = pneg %p83
      $region14: #{attention_forward.1} parent=11 // pred_check_branch
        %147 = sbr.rel (%p145) target = $region16
      $region15: #{attention_forward.1} parent=11 // pred_region
        _
      $region16: #{attention_forward.1} parent=11 // pred_fallthru
        _
      // Predicated region
      $region17: #{attention_forward.1} parent=11 // pred_check
        %p148 = pneg %p104
      $region18: #{attention_forward.1} parent=11 // pred_check_branch
        %150 = sbr.rel (%p148) target = $region20
      $region19: #{attention_forward.1} parent=11 // pred_region
        _
      $region20: #{attention_forward.1} parent=11 // pred_fallthru
        _
    $region12: #{attention_forward.1} parent=5 // pred_fallthru
      _
    %p151 = scmp.lt.s32.totalorder %s10, 2
    // Predicated region
    $region21: #{attention_forward.1} parent=5 // pred_check
      %p152 = pneg %p151
    $region22: #{attention_forward.1} parent=5 // pred_check_branch
      %154 = sbr.rel (%p152) target = $region24
    $region23: #{attention_forward.1} parent=5 // pred_region
      // Predicated region
      $region25: #{attention_forward.1} parent=23 // pred_check
        %p155 = pneg %p30
      $region26: #{attention_forward.1} parent=23 // pred_check_branch
        %157 = sbr.rel (%p155) target = $region28
      $region27: #{attention_forward.1} parent=23 // pred_region
        %p158 = scmp.lt.s32.totalorder %s10, 1
        %s159 = scalar_select %p158, %s10, 1
        %s160 = smul.addr %s159, 2
        %s161 = smul.addr %s160, 4
        %s162 = scalar_lea.vmem %s0, %s161
      $region28: #{attention_forward.1} parent=23 // pred_fallthru
        _
      // Predicated region
      $region29: #{attention_forward.1} parent=23 // pred_check
        %p163 = pneg %p56
      $region30: #{attention_forward.1} parent=23 // pred_check_branch
        %165 = sbr.rel (%p163) target = $region32
      $region31: #{attention_forward.1} parent=23 // pred_region
        %p166 = scmp.lt.s32.totalorder %s10, 1
        %s167 = scalar_select %p166, %s10, 1
        %s168 = smul.addr %s167, 2
        %s169 = smul.addr %s168, 2
        %s170 = scalar_lea.vmem %s1, %s169
      $region32: #{attention_forward.1} parent=23 // pred_fallthru
        _
    $region24: #{attention_forward.1} parent=5 // pred_fallthru
      _
    %p171 = scmp.le.s32.totalorder 1, %s10
    %p172 = scmp.lt.s32.totalorder %s10, 3
    %p173 = pnand %p171, %p172
    %p174 = pneg %p173
    // Predicated region
    $region33: #{attention_forward.1} parent=5 // pred_check
      _
    $region34: #{attention_forward.1} parent=5 // pred_check_branch
      %176 = sbr.rel (%p173) target = $region36
    $region35: #{attention_forward.1} parent=5 // pred_region
      %s177 = ssub.s32 %s10, 1
      %p178 = scmp.lt.s32.totalorder %s15, 1
      %s179 = scalar_select %p178, %s15, 1
      %s180 = smul.addr %s179, 2
      %s181 = smul.addr %s180, 4
      %s182 = scalar_lea.vmem %s0, %s181
      %p183 = pneg %p36
      %p184 = pneg %p33
      %p185 = scmp.lt.s32.totalorder %s15, 1
      %s186 = scalar_select %p185, %s15, 1
      %s187 = smul.addr %s186, 2
      %s188 = smul.addr %s187, 2
      %s189 = scalar_lea.vmem %s1, %s188
      %p190 = pneg %p62
      %p191 = pneg %p59
      %p192 = pneg %p83
      %p193 = pneg %p80
      %p194 = pneg %p104
      %p195 = pneg %p101
      %p196 = pneg %p130
      %p197 = pneg %p127
      %p198 = scmp.lt.s32.totalorder %s15, 1
      %s199 = scalar_select %p198, %s15, 1
      %s200 = smul.addr %s199, 2
      %s201 = scalar_lea.vmem %s4, %s200
      %p202 = scmp.lt.s32.totalorder %s15, 1
      %s203 = scalar_select %p202, %s15, 1
      %s204 = smul.addr %s203, 2
      %s205 = smul.addr %s204, 4
      %s206 = scalar_lea.vmem %s0, %s205
      %p207 = scmp.lt.s32.totalorder %s15, 1
      %s208 = scalar_select %p207, %s15, 1
      %s209 = smul.addr %s208, 2
      %s210 = smul.addr %s209, 2
      %s211 = scalar_lea.vmem %s1, %s210
      %p212 = scmp.lt.s32.totalorder %s15, 1
      %s213 = scalar_select %p212, %s15, 1
      %s214 = smul.addr %s213, 2
      %s215 = scalar_lea.vmem %s4, %s214
      %217 = vst [vmem:[#allocation2] sm:$0xff] 0.0
      %218 = vst [vmem:[#allocation2 + $0x20] sm:$0xff] 0.0
      %219 = vst [vmem:[#allocation2 + $0x18] sm:$0xff] 0.0
      %220 = vst [vmem:[#allocation2 + $0x38] sm:$0xff] 0.0
      %221 = vst [vmem:[#allocation4] sm:$0xff] 0.0
      %222 = vst [vmem:[#allocation4 + $0x20] sm:$0xff] 0.0
      %223 = vst [vmem:[#allocation4 + $0x18] sm:$0xff] 0.0
      %224 = vst [vmem:[#allocation4 + $0x38] sm:$0xff] 0.0
      %225 = vst [vmem:[#allocation2 + $0x28] sm:$0xf0] 0.0
      %226 = vst [vmem:[#allocation2 + $0x30] sm:$0xf0] 0.0
      %v227 = vld [vmem:[%s206] sm:$0xff]
      %v228 = vunpack.c.l.bf16 %v227
      %v229 = vunpack.c.h.bf16 %v227
      %230 = vst [vmem:[#allocation2 + $0x8] sm:$0xff] %v228
      %231 = vst [vmem:[#allocation2 + $0x10] sm:$0xff] %v229
      %v232 = vld [vmem:[%s211] sm:$0xf]
      %v233 = vunpack.c.l.bf16 %v232
      %v235 = vcombine.high %v233, %v233
      %237 = vst [vmem:[#allocation2 + $0x28] sm:$0xf] %v233
      %238 = vst [vmem:[#allocation2 + $0x30] sm:$0xf] %v235
      %v239 = vlaneseq
      %v240 = vand.u32 %v239, 127
      %v241 = vadd.s32 %v240, 128
      %vm242 = vcmp.lt.s32.totalorder %v240, 0
      %v243 = vsub.s32 0, %v240
      %v244 = vsel %vm242, %v243, %v240
      %v245 = vshrl.u32 %v244, 4
      %v246 = vand.u32 %v244, 15
      %v247 = vsub.s32 0, %v246
      %v248 = vsel %vm242, %v247, %v246
      %vm249 = vcmp.lt.s32.totalorder %v241, 0
      %v250 = vsub.s32 0, %v241
      %v251 = vsel %vm249, %v250, %v241
      %v252 = vshrl.u32 %v251, 4
      %v253 = vand.u32 %v251, 15
      %v254 = vsub.s32 0, %v253
      %v255 = vsel %vm249, %v254, %v253
      %vm256 = vcmp.ne.s32.totalorder %v248, 0
      %vm257 = vcmp.ne.s32.totalorder %v255, 0
      %vm258 = vcmp.lt.s32.totalorder %v248, 0
      %vm259 = vcmp.lt.s32.totalorder %v255, 0
      %vm260 = vmand %vm258, %vm256
      %vm261 = vmand %vm259, %vm257
      %v262 = vadd.s32 %v248, 16
      %v263 = vadd.s32 %v255, 16
      %v264 = vsel %vm260, %v262, %v248
      %v265 = vsel %vm261, %v263, %v255
      %vm266 = vcmp.ge.s32.totalorder %v264, 1
      %vm267 = vcmp.ge.s32.totalorder %v265, 1
      %vm268 = vcmp.lt.s32.totalorder %v264, 17
      %vm269 = vcmp.lt.s32.totalorder %v265, 17
      %vm270 = vmand %vm266, %vm268
      %vm271 = vmand %vm267, %vm269
      %v272 = vld [vmem:[#allocation2] sm:$0xff]
      %v273 = vld [vmem:[#allocation2 + $0x8] sm:$0xff]
      %v274 = vld [vmem:[#allocation2 + $0x10] sm:$0xff]
      %v275 = vld [vmem:[#allocation2 + $0x20] sm:$0xff]
      %v276 = vld [vmem:[#allocation2 + $0x28] sm:$0xff]
      %v277 = vld [vmem:[#allocation2 + $0x30] sm:$0xff]
      %284 = vrot.lane.b32.xlu0 %v272, 17
      %v285 = vpop.permute.xlu0 %284
      %286 = vrot.lane.b32.xlu0 %v273, 17
      %v287 = vpop.permute.xlu0 %286
      %288 = vrot.lane.b32.xlu0 %v274, 17
      %v289 = vpop.permute.xlu0 %288
      %290 = vrot.lane.b32.xlu0 %v275, 17
      %v291 = vpop.permute.xlu0 %290
      %292 = vrot.lane.b32.xlu0 %v276, 17
      %v293 = vpop.permute.xlu0 %292
      %294 = vrot.lane.b32.xlu0 %v277, 17
      %v295 = vpop.permute.xlu0 %294
      %vm296 = vcmask 138240
      %v297 = vsel %vm296, %v285, %v287
      %v298 = vsel %vm296, %v287, %v289
      %v299 = vsel %vm296, %v291, %v293
      %v300 = vsel %vm296, %v293, %v295
      %v305 = vsel %vm270, %v297, 0.0
      %v306 = vsel %vm271, %v298, 0.0
      %v307 = vsel %vm270, %v299, 0.0
      %v308 = vsel %vm271, %v300, 0.0
      %v309 = vpack.c.bf16 %v307, %v305
      %v310 = vpack.c.bf16 %v308, %v306
      %311 = vst [vmem:[#allocation3] sm:$0xff] %v309
      %312 = vst [vmem:[#allocation3 + $0x8] sm:$0xff] %v310
      %v313 = vld [vmem:[#allocation2] sm:$0xff]
      %v314 = vld [vmem:[#allocation2 + $0x8] sm:$0xff]
      %v315 = vld [vmem:[#allocation2 + $0x10] sm:$0xff]
      %v316 = vld [vmem:[#allocation2 + $0x20] sm:$0xff]
      %v317 = vld [vmem:[#allocation2 + $0x28] sm:$0xff]
      %v318 = vld [vmem:[#allocation2 + $0x30] sm:$0xff]
      %325 = vrot.lane.b32.xlu0 %v313, 1
      %v326 = vpop.permute.xlu0 %325
      %327 = vrot.lane.b32.xlu0 %v314, 1
      %v328 = vpop.permute.xlu0 %327
      %329 = vrot.lane.b32.xlu0 %v315, 1
      %v330 = vpop.permute.xlu0 %329
      %331 = vrot.lane.b32.xlu0 %v316, 1
      %v332 = vpop.permute.xlu0 %331
      %333 = vrot.lane.b32.xlu0 %v317, 1
      %v334 = vpop.permute.xlu0 %333
      %335 = vrot.lane.b32.xlu0 %v318, 1
      %v336 = vpop.permute.xlu0 %335
      %vm337 = vcmask 7168
      %v338 = vsel %vm337, %v326, %v328
      %v339 = vsel %vm337, %v328, %v330
      %v340 = vsel %vm337, %v332, %v334
      %v341 = vsel %vm337, %v334, %v336
      %v346 = vsel %vm270, %v338, 0.0
      %v347 = vsel %vm271, %v339, 0.0
      %v348 = vsel %vm270, %v340, 0.0
      %v349 = vsel %vm271, %v341, 0.0
      %v350 = vpack.c.bf16 %v348, %v346
      %v351 = vpack.c.bf16 %v349, %v347
      %352 = vst [vmem:[#allocation3 + $0x30] sm:$0xff] %v350
      %353 = vst [vmem:[#allocation3 + $0x38] sm:$0xff] %v351
      %v354 = vld [vmem:[#allocation2 + $0x8] sm:$0xff]
      %v355 = vld [vmem:[#allocation2 + $0x10] sm:$0xff]
      %v356 = vld [vmem:[#allocation2 + $0x18] sm:$0xff]
      %v357 = vld [vmem:[#allocation2 + $0x28] sm:$0xff]
      %v358 = vld [vmem:[#allocation2 + $0x30] sm:$0xff]
      %v359 = vld [vmem:[#allocation2 + $0x38] sm:$0xff]
      %366 = vrot.lane.b32.xlu0 %v354, 113
      %v367 = vpop.permute.xlu0 %366
      %368 = vrot.lane.b32.xlu0 %v355, 113
      %v369 = vpop.permute.xlu0 %368
      %370 = vrot.lane.b32.xlu0 %v356, 113
      %v371 = vpop.permute.xlu0 %370
      %372 = vrot.lane.b32.xlu0 %v357, 113
      %v373 = vpop.permute.xlu0 %372
      %374 = vrot.lane.b32.xlu0 %v358, 113
      %v375 = vpop.permute.xlu0 %374
      %376 = vrot.lane.b32.xlu0 %v359, 113
      %v377 = vpop.permute.xlu0 %376
      %vm378 = vcmask 924672
      %v379 = vsel %vm378, %v367, %v369
      %v380 = vsel %vm378, %v369, %v371
      %v381 = vsel %vm378, %v373, %v375
      %v382 = vsel %vm378, %v375, %v377
      %v387 = vsel %vm270, %v379, 0.0
      %v388 = vsel %vm271, %v380, 0.0
      %v389 = vsel %vm270, %v381, 0.0
      %v390 = vsel %vm271, %v382, 0.0
      %v391 = vpack.c.bf16 %v389, %v387
      %v392 = vpack.c.bf16 %v390, %v388
      %393 = vst [vmem:[#allocation3 + $0x60] sm:$0xff] %v391
      %394 = vst [vmem:[#allocation3 + $0x68] sm:$0xff] %v392
      %v395 = vld [vmem:[#allocation2] sm:$0xff]
      %v396 = vld [vmem:[#allocation2 + $0x8] sm:$0xff]
      %v397 = vld [vmem:[#allocation2 + $0x10] sm:$0xff]
      %v398 = vld [vmem:[#allocation2 + $0x20] sm:$0xff]
      %v399 = vld [vmem:[#allocation2 + $0x28] sm:$0xff]
      %v400 = vld [vmem:[#allocation2 + $0x30] sm:$0xff]
      %v401 = vpack.c.bf16 %v398, %v395
      %v402 = vpack.c.bf16 %v399, %v396
      %v403 = vpack.c.bf16 %v400, %v397
      %407 = vrot.lane.b32.xlu0 %v401, 16
      %v408 = vpop.permute.xlu0 %407
      %409 = vrot.lane.b32.xlu0 %v402, 16
      %v410 = vpop.permute.xlu0 %409
      %411 = vrot.lane.b32.xlu0 %v403, 16
      %v412 = vpop.permute.xlu0 %411
      %vm413 = vcmask 130048
      %v414 = vsel %vm413, %v408, %v410
      %v415 = vsel %vm413, %v410, %v412
      %418 = vst [vmem:[#allocation3 + $0x10] sm:$0xff] %v414
      %419 = vst [vmem:[#allocation3 + $0x18] sm:$0xff] %v415
      %v420 = vld [vmem:[#allocation2 + $0x8] sm:$0xff]
      %v421 = vld [vmem:[#allocation2 + $0x10] sm:$0xff]
      %v422 = vld [vmem:[#allocation2 + $0x28] sm:$0xff]
      %v423 = vld [vmem:[#allocation2 + $0x30] sm:$0xff]
      %v424 = vpack.c.bf16 %v422, %v420
      %v425 = vpack.c.bf16 %v423, %v421
      %426 = vst [vmem:[#allocation3 + $0x40] sm:$0xff] %v424
      %427 = vst [vmem:[#allocation3 + $0x48] sm:$0xff] %v425
      %v428 = vld [vmem:[#allocation2 + $0x8] sm:$0xff]
      %v429 = vld [vmem:[#allocation2 + $0x10] sm:$0xff]
      %v430 = vld [vmem:[#allocation2 + $0x18] sm:$0xff]
      %v431 = vld [vmem:[#allocation2 + $0x28] sm:$0xff]
      %v432 = vld [vmem:[#allocation2 + $0x30] sm:$0xff]
      %v433 = vld [vmem:[#allocation2 + $0x38] sm:$0xff]
      %v434 = vpack.c.bf16 %v431, %v428
      %v435 = vpack.c.bf16 %v432, %v429
      %v436 = vpack.c.bf16 %v433, %v430
      %440 = vrot.lane.b32.xlu0 %v434, 112
      %v441 = vpop.permute.xlu0 %440
      %442 = vrot.lane.b32.xlu0 %v435, 112
      %v443 = vpop.permute.xlu0 %442
      %444 = vrot.lane.b32.xlu0 %v436, 112
      %v445 = vpop.permute.xlu0 %444
      %vm446 = vcmask 916480
      %v447 = vsel %vm446, %v441, %v443
      %v448 = vsel %vm446, %v443, %v445
      %451 = vst [vmem:[#allocation3 + $0x70] sm:$0xff] %v447
      %452 = vst [vmem:[#allocation3 + $0x78] sm:$0xff] %v448
      %vm453 = vcmp.ge.s32.totalorder %v264, 4294967295
      %vm454 = vcmp.ge.s32.totalorder %v265, 4294967295
      %vm455 = vcmp.lt.s32.totalorder %v264, 15
      %vm456 = vcmp.lt.s32.totalorder %v265, 15
      %vm457 = vmand %vm453, %vm455
      %vm458 = vmand %vm454, %vm456
      %v459 = vld [vmem:[#allocation2] sm:$0xff]
      %v460 = vld [vmem:[#allocation2 + $0x8] sm:$0xff]
      %v461 = vld [vmem:[#allocation2 + $0x10] sm:$0xff]
      %v462 = vld [vmem:[#allocation2 + $0x20] sm:$0xff]
      %v463 = vld [vmem:[#allocation2 + $0x28] sm:$0xff]
      %v464 = vld [vmem:[#allocation2 + $0x30] sm:$0xff]
      %471 = vrot.lane.b32.xlu0 %v459, 15
      %v472 = vpop.permute.xlu0 %471
      %473 = vrot.lane.b32.xlu0 %v460, 15
      %v474 = vpop.permute.xlu0 %473
      %475 = vrot.lane.b32.xlu0 %v461, 15
      %v476 = vpop.permute.xlu0 %475
      %477 = vrot.lane.b32.xlu0 %v462, 15
      %v478 = vpop.permute.xlu0 %477
      %479 = vrot.lane.b32.xlu0 %v463, 15
      %v480 = vpop.permute.xlu0 %479
      %481 = vrot.lane.b32.xlu0 %v464, 15
      %v482 = vpop.permute.xlu0 %481
      %vm483 = vcmask 121856
      %v484 = vsel %vm483, %v472, %v474
      %v485 = vsel %vm483, %v474, %v476
      %v486 = vsel %vm483, %v478, %v480
      %v487 = vsel %vm483, %v480, %v482
      %v492 = vsel %vm457, %v484, 0.0
      %v493 = vsel %vm458, %v485, 0.0
      %v494 = vsel %vm457, %v486, 0.0
      %v495 = vsel %vm458, %v487, 0.0
      %v496 = vpack.c.bf16 %v494, %v492
      %v497 = vpack.c.bf16 %v495, %v493
      %498 = vst [vmem:[#allocation3 + $0x20] sm:$0xff] %v496
      %499 = vst [vmem:[#allocation3 + $0x28] sm:$0xff] %v497
      %v500 = vld [vmem:[#allocation2 + $0x8] sm:$0xff]
      %v501 = vld [vmem:[#allocation2 + $0x10] sm:$0xff]
      %v502 = vld [vmem:[#allocation2 + $0x18] sm:$0xff]
      %v503 = vld [vmem:[#allocation2 + $0x28] sm:$0xff]
      %v504 = vld [vmem:[#allocation2 + $0x30] sm:$0xff]
      %v505 = vld [vmem:[#allocation2 + $0x38] sm:$0xff]
      %512 = vrot.lane.b32.xlu0 %v500, 127
      %v513 = vpop.permute.xlu0 %512
      %514 = vrot.lane.b32.xlu0 %v501, 127
      %v515 = vpop.permute.xlu0 %514
      %516 = vrot.lane.b32.xlu0 %v502, 127
      %v517 = vpop.permute.xlu0 %516
      %518 = vrot.lane.b32.xlu0 %v503, 127
      %v519 = vpop.permute.xlu0 %518
      %520 = vrot.lane.b32.xlu0 %v504, 127
      %v521 = vpop.permute.xlu0 %520
      %522 = vrot.lane.b32.xlu0 %v505, 127
      %v523 = vpop.permute.xlu0 %522
      %vm524 = vcmask 1039360
      %v525 = vsel %vm524, %v513, %v515
      %v526 = vsel %vm524, %v515, %v517
      %v527 = vsel %vm524, %v519, %v521
      %v528 = vsel %vm524, %v521, %v523
      %v533 = vsel %vm457, %v525, 0.0
      %v534 = vsel %vm458, %v526, 0.0
      %v535 = vsel %vm457, %v527, 0.0
      %v536 = vsel %vm458, %v528, 0.0
      %v537 = vpack.c.bf16 %v535, %v533
      %v538 = vpack.c.bf16 %v536, %v534
      %539 = vst [vmem:[#allocation3 + $0x50] sm:$0xff] %v537
      %540 = vst [vmem:[#allocation3 + $0x58] sm:$0xff] %v538
      %v541 = vld [vmem:[#allocation2 + $0x8] sm:$0xff]
      %v542 = vld [vmem:[#allocation2 + $0x10] sm:$0xff]
      %v543 = vld [vmem:[#allocation2 + $0x18] sm:$0xff]
      %v544 = vld [vmem:[#allocation2 + $0x28] sm:$0xff]
      %v545 = vld [vmem:[#allocation2 + $0x30] sm:$0xff]
      %v546 = vld [vmem:[#allocation2 + $0x38] sm:$0xff]
      %553 = vrot.lane.b32.xlu0 %v541, 111
      %v554 = vpop.permute.xlu0 %553
      %555 = vrot.lane.b32.xlu0 %v542, 111
      %v556 = vpop.permute.xlu0 %555
      %557 = vrot.lane.b32.xlu0 %v543, 111
      %v558 = vpop.permute.xlu0 %557
      %559 = vrot.lane.b32.xlu0 %v544, 111
      %v560 = vpop.permute.xlu0 %559
      %561 = vrot.lane.b32.xlu0 %v545, 111
      %v562 = vpop.permute.xlu0 %561
      %563 = vrot.lane.b32.xlu0 %v546, 111
      %v564 = vpop.permute.xlu0 %563
      %vm565 = vcmask 908288
      %v566 = vsel %vm565, %v554, %v556
      %v567 = vsel %vm565, %v556, %v558
      %v568 = vsel %vm565, %v560, %v562
      %v569 = vsel %vm565, %v562, %v564
      %v574 = vsel %vm457, %v566, 0.0
      %v575 = vsel %vm458, %v567, 0.0
      %v576 = vsel %vm457, %v568, 0.0
      %v577 = vsel %vm458, %v569, 0.0
      %v578 = vpack.c.bf16 %v576, %v574
      %v579 = vpack.c.bf16 %v577, %v575
      %580 = vst [vmem:[#allocation3 + $0x80] sm:$0xff] %v578
      %581 = vst [vmem:[#allocation3 + $0x88] sm:$0xff] %v579
      %v582 = vld [vmem:[%s2] sm:$0xff]
      %v583 = vld [vmem:[%s2 + $0x8] sm:$0xff]
      %v584 = vld [vmem:[#allocation3] sm:$0xff]
      %v585 = vld [vmem:[#allocation3 + $0x8] sm:$0xff]
      %v586 = vld [vmem:[#allocation3 + $0x10] sm:$0xff]
      %v587 = vld [vmem:[#allocation3 + $0x18] sm:$0xff]
      %v588 = vld [vmem:[#allocation3 + $0x20] sm:$0xff]
      %v589 = vld [vmem:[#allocation3 + $0x28] sm:$0xff]
      %v590 = vld [vmem:[#allocation3 + $0x30] sm:$0xff]
      %v591 = vld [vmem:[#allocation3 + $0x38] sm:$0xff]
      %v592 = vld [vmem:[#allocation3 + $0x40] sm:$0xff]
      %v593 = vld [vmem:[#allocation3 + $0x48] sm:$0xff]
      %v594 = vld [vmem:[#allocation3 + $0x50] sm:$0xff]
      %v595 = vld [vmem:[#allocation3 + $0x58] sm:$0xff]
      %v596 = vld [vmem:[#allocation3 + $0x60] sm:$0xff]
      %v597 = vld [vmem:[#allocation3 + $0x68] sm:$0xff]
      %v598 = vld [vmem:[#allocation3 + $0x70] sm:$0xff]
      %v599 = vld [vmem:[#allocation3 + $0x78] sm:$0xff]
      %v600 = vld [vmem:[#allocation3 + $0x80] sm:$0xff]
      %v601 = vld [vmem:[#allocation3 + $0x88] sm:$0xff]
      %v604 = vunpack.c.l.b16 %v582
      %v605 = vunpack.c.h.b16 %v582
      %v606 = vunpack.c.l.b16 %v583
      %v607 = vunpack.c.h.b16 %v583
      %v608 = vpack.c.b16 %v606, %v604
      %v609 = vpack.c.b16 %v607, %v605
      %vm611 = vcmask 130048
      %v613 = vsel %vm611, %v609, 0
      %615 = vmatprep.subr.bf16.mxu0 %v585
      %616 = vmatpush1.bf16.msra.mxu0 %v584
      %617 = vmatprep.subr.bf16.mxu0 %v587
      %618 = vmatpush1.bf16.msra.mxu0 %v586
      %619 = vmatprep.subr.bf16.mxu0 %v589
      %620 = vmatpush1.bf16.msra.mxu0 %v588
      %621 = vmatprep.subr.bf16.mxu0 %v591
      %622 = vmatpush1.bf16.msra.mxu0 %v590
      %623 = vmatprep.subr.bf16.mxu0 %v593
      %624 = vmatpush1.bf16.msra.mxu0 %v592
      %625 = vmatprep.subr.bf16.mxu0 %v595
      %626 = vmatpush1.bf16.msra.mxu0 %v594
      %627 = vmatprep.subr.bf16.mxu0 %v597
      %628 = vmatpush1.bf16.msra.mxu0 %v596
      %629 = vmatprep.subr.bf16.mxu0 %v599
      %630 = vmatpush1.bf16.msra.mxu0 %v598
      %631 = vmatprep.subr.bf16.mxu0 %v601
      %632 = vmatpush1.bf16.msra.mxu0 %v600
      %633 = vmatprep.subr.bf16.mxu0 0
      %634 = vmatpush1.bf16.msra.mxu0 0
      %635 = vmatprep.subr.bf16.mxu0 0
      %636 = vmatpush1.bf16.msra.mxu0 0
      %637 = vmatprep.subr.bf16.mxu0 0
      %638 = vmatpush1.bf16.msra.mxu0 0
      %639 = vmatprep.subr.bf16.mxu0 0
      %640 = vmatpush1.bf16.msra.mxu0 0
      %641 = vmatprep.subr.bf16.mxu0 0
      %642 = vmatpush1.bf16.msra.mxu0 0
      %643 = vmatprep.subr.bf16.mxu0 0
      %644 = vmatpush1.bf16.msra.mxu0 0
      %645 = vmatprep.subr.bf16.mxu0 0
      %646 = vmatpush1.bf16.msra.mxu0 0
      %647 = vmatprep.mubr.bf16.mxu0 %v613
      %648 = vmatmul.mubr.bf16.gmra.mrb[0].mxu0 %v608
      %v649 = vpop.f32.mrb[0].mxu0
      %v650 = vadd.f32 0.0, %v649
      %v651 = vpop.f32.mrb[0].mxu0
      %v652 = vadd.f32 0.0, %v651
      %v653 = vpop.f32.mrb[0].mxu0
      %v654 = vadd.f32 0.0, %v653
      %v655 = vpop.f32.mrb[0].mxu0
      %v656 = vadd.f32 0.0, %v655
      %657 = vdwg.mxu0
      %v658 = vtanh.pop %v650
      %v659 = vtanh.pop %v652
      %v660 = vtanh.pop %v654
      %v661 = vtanh.pop %v656
      %662 = vst [vmem:[#allocation4 + $0x8] sm:$0xff] %v658
      %663 = vst [vmem:[#allocation4 + $0x10] sm:$0xff] %v659
      %664 = vst [vmem:[#allocation4 + $0x28] sm:$0xff] %v660
      %665 = vst [vmem:[#allocation4 + $0x30] sm:$0xff] %v661
      %v666 = vld [vmem:[%s3] sm:$0xff]
      %v667 = vld [vmem:[%s3 + $0x8] sm:$0xff]
      %669 = vset.pattern.permute.xlu0 4
      %670 = vperm.xlu0 %669, %v666
      %v671 = vpop.permute.xlu0 %670
      %674 = vset.pattern.permute.xlu0 4
      %675 = vperm.xlu0 %674, %v667
      %v676 = vpop.permute.xlu0 %675
      %v678 = vmul.f32 %v658, %v671
      %v679 = vmul.f32 %v659, %v671
      %v680 = vmul.f32 %v660, %v676
      %v681 = vmul.f32 %v661, %v676
      %v682 = vld [vmem:[#allocation4] sm:$0xff]
      %v683 = vld [vmem:[#allocation4 + $0x8] sm:$0xff]
      %v684 = vld [vmem:[#allocation4 + $0x10] sm:$0xff]
      %v685 = vld [vmem:[#allocation4 + $0x20] sm:$0xff]
      %v686 = vld [vmem:[#allocation4 + $0x28] sm:$0xff]
      %v687 = vld [vmem:[#allocation4 + $0x30] sm:$0xff]
      %688 = vset.pattern.permute.xlu0 0
      %689 = vperm.xlu0 %688, %v666
      %v690 = vpop.permute.xlu0 %689
      %692 = vset.pattern.permute.xlu0 0
      %693 = vperm.xlu0 %692, %v667
      %v694 = vpop.permute.xlu0 %693
      %v696 = vmul.f32 %v682, %v690
      %v697 = vmul.f32 %v683, %v690
      %v698 = vmul.f32 %v684, %v690
      %v699 = vmul.f32 %v685, %v694
      %v700 = vmul.f32 %v686, %v694
      %v701 = vmul.f32 %v687, %v694
      %702 = vset.pattern.permute.xlu0 3
      %703 = vperm.xlu0 %702, %v666
      %v704 = vpop.permute.xlu0 %703
      %706 = vset.pattern.permute.xlu0 3
      %707 = vperm.xlu0 %706, %v667
      %v708 = vpop.permute.xlu0 %707
      %v710 = vmul.f32 %v682, %v704
      %v711 = vmul.f32 %v683, %v704
      %v712 = vmul.f32 %v684, %v704
      %v713 = vmul.f32 %v685, %v708
      %v714 = vmul.f32 %v686, %v708
      %v715 = vmul.f32 %v687, %v708
      %722 = vrot.lane.b32.xlu0 %v710, 112
      %v723 = vpop.permute.xlu0 %722
      %724 = vrot.lane.b32.xlu0 %v711, 112
      %v725 = vpop.permute.xlu0 %724
      %726 = vrot.lane.b32.xlu0 %v712, 112
      %v727 = vpop.permute.xlu0 %726
      %728 = vrot.lane.b32.xlu0 %v713, 112
      %v729 = vpop.permute.xlu0 %728
      %730 = vrot.lane.b32.xlu0 %v714, 112
      %v731 = vpop.permute.xlu0 %730
      %732 = vrot.lane.b32.xlu0 %v715, 112
      %v733 = vpop.permute.xlu0 %732
      %vm734 = vcmask 916480
      %v735 = vsel %vm734, %v723, %v725
      %v736 = vsel %vm734, %v725, %v727
      %v737 = vsel %vm734, %v729, %v731
      %v738 = vsel %vm734, %v731, %v733
      %v745 = vadd.f32 %v696, %v735
      %v746 = vadd.f32 %v697, %v736
      %v747 = vadd.f32 %v698, %v727
      %v748 = vadd.f32 %v699, %v737
      %v749 = vadd.f32 %v700, %v738
      %v750 = vadd.f32 %v701, %v733
      %v751 = vld [vmem:[#allocation4 + $0x8] sm:$0xff]
      %v752 = vld [vmem:[#allocation4 + $0x10] sm:$0xff]
      %v753 = vld [vmem:[#allocation4 + $0x18] sm:$0xff]
      %v754 = vld [vmem:[#allocation4 + $0x28] sm:$0xff]
      %v755 = vld [vmem:[#allocation4 + $0x30] sm:$0xff]
      %v756 = vld [vmem:[#allocation4 + $0x38] sm:$0xff]
      %757 = vset.pattern.permute.xlu0 6
      %758 = vperm.xlu0 %757, %v666
      %v759 = vpop.permute.xlu0 %758
      %761 = vset.pattern.permute.xlu0 6
      %762 = vperm.xlu0 %761, %v667
      %v763 = vpop.permute.xlu0 %762
      %v765 = vmul.f32 %v751, %v759
      %v766 = vmul.f32 %v752, %v759
      %v767 = vmul.f32 %v753, %v759
      %v768 = vmul.f32 %v754, %v763
      %v769 = vmul.f32 %v755, %v763
      %v770 = vmul.f32 %v756, %v763
      %777 = vrot.lane.b32.xlu0 %v765, 96
      %v778 = vpop.permute.xlu0 %777
      %779 = vrot.lane.b32.xlu0 %v766, 96
      %v780 = vpop.permute.xlu0 %779
      %781 = vrot.lane.b32.xlu0 %v767, 96
      %v782 = vpop.permute.xlu0 %781
      %783 = vrot.lane.b32.xlu0 %v768, 96
      %v784 = vpop.permute.xlu0 %783
      %785 = vrot.lane.b32.xlu0 %v769, 96
      %v786 = vpop.permute.xlu0 %785
      %787 = vrot.lane.b32.xlu0 %v770, 96
      %v788 = vpop.permute.xlu0 %787
      %vm789 = vcmask 785408
      %v790 = vsel %vm789, %v778, %v780
      %v791 = vsel %vm789, %v780, %v782
      %v792 = vsel %vm789, %v784, %v786
      %v793 = vsel %vm789, %v786, %v788
      %v800 = vadd.f32 %v745, %v778
      %v801 = vadd.f32 %v746, %v790
      %v802 = vadd.f32 %v747, %v791
      %v803 = vadd.f32 %v748, %v784
      %v804 = vadd.f32 %v749, %v792
      %v805 = vadd.f32 %v750, %v793
      %812 = vrot.lane.b32.xlu0 %v800, 17
      %v813 = vpop.permute.xlu0 %812
      %814 = vrot.lane.b32.xlu0 %v801, 17
      %v815 = vpop.permute.xlu0 %814
      %816 = vrot.lane.b32.xlu0 %v802, 17
      %v817 = vpop.permute.xlu0 %816
      %818 = vrot.lane.b32.xlu0 %v803, 17
      %v819 = vpop.permute.xlu0 %818
      %820 = vrot.lane.b32.xlu0 %v804, 17
      %v821 = vpop.permute.xlu0 %820
      %822 = vrot.lane.b32.xlu0 %v805, 17
      %v823 = vpop.permute.xlu0 %822
      %v824 = vsel %vm296, %v813, %v815
      %v825 = vsel %vm296, %v815, %v817
      %v826 = vsel %vm296, %v819, %v821
      %v827 = vsel %vm296, %v821, %v823
      %v832 = vsel %vm270, %v824, 0.0
      %v833 = vsel %vm271, %v825, 0.0
      %v834 = vsel %vm270, %v826, 0.0
      %v835 = vsel %vm271, %v827, 0.0
      %v836 = vadd.f32 %v678, %v832
      %v837 = vadd.f32 %v679, %v833
      %v838 = vadd.f32 %v680, %v834
      %v839 = vadd.f32 %v681, %v835
      %840 = vset.pattern.permute.xlu0 1
      %841 = vperm.xlu0 %840, %v666
      %v842 = vpop.permute.xlu0 %841
      %844 = vset.pattern.permute.xlu0 1
      %845 = vperm.xlu0 %844, %v667
      %v846 = vpop.permute.xlu0 %845
      %v848 = vmul.f32 %v682, %v842
      %v849 = vmul.f32 %v683, %v842
      %v850 = vmul.f32 %v684, %v842
      %v851 = vmul.f32 %v685, %v846
      %v852 = vmul.f32 %v686, %v846
      %v853 = vmul.f32 %v687, %v846
      %854 = vset.pattern.permute.xlu0 7
      %855 = vperm.xlu0 %854, %v666
      %v856 = vpop.permute.xlu0 %855
      %858 = vset.pattern.permute.xlu0 7
      %859 = vperm.xlu0 %858, %v667
      %v860 = vpop.permute.xlu0 %859
      %v862 = vmul.f32 %v751, %v856
      %v863 = vmul.f32 %v752, %v856
      %v864 = vmul.f32 %v753, %v856
      %v865 = vmul.f32 %v754, %v860
      %v866 = vmul.f32 %v755, %v860
      %v867 = vmul.f32 %v756, %v860
      %874 = vrot.lane.b32.xlu0 %v862, 96
      %v875 = vpop.permute.xlu0 %874
      %876 = vrot.lane.b32.xlu0 %v863, 96
      %v877 = vpop.permute.xlu0 %876
      %878 = vrot.lane.b32.xlu0 %v864, 96
      %v879 = vpop.permute.xlu0 %878
      %880 = vrot.lane.b32.xlu0 %v865, 96
      %v881 = vpop.permute.xlu0 %880
      %882 = vrot.lane.b32.xlu0 %v866, 96
      %v883 = vpop.permute.xlu0 %882
      %884 = vrot.lane.b32.xlu0 %v867, 96
      %v885 = vpop.permute.xlu0 %884
      %v886 = vsel %vm789, %v875, %v877
      %v887 = vsel %vm789, %v877, %v879
      %v888 = vsel %vm789, %v881, %v883
      %v889 = vsel %vm789, %v883, %v885
      %v896 = vadd.f32 %v848, %v875
      %v897 = vadd.f32 %v849, %v886
      %v898 = vadd.f32 %v850, %v887
      %v899 = vadd.f32 %v851, %v881
      %v900 = vadd.f32 %v852, %v888
      %v901 = vadd.f32 %v853, %v889
      %908 = vrot.lane.b32.xlu0 %v896, 16
      %v909 = vpop.permute.xlu0 %908
      %910 = vrot.lane.b32.xlu0 %v897, 16
      %v911 = vpop.permute.xlu0 %910
      %912 = vrot.lane.b32.xlu0 %v898, 16
      %v913 = vpop.permute.xlu0 %912
      %914 = vrot.lane.b32.xlu0 %v899, 16
      %v915 = vpop.permute.xlu0 %914
      %916 = vrot.lane.b32.xlu0 %v900, 16
      %v917 = vpop.permute.xlu0 %916
      %918 = vrot.lane.b32.xlu0 %v901, 16
      %v919 = vpop.permute.xlu0 %918
      %v920 = vsel %vm611, %v909, %v911
      %v921 = vsel %vm611, %v911, %v913
      %v922 = vsel %vm611, %v915, %v917
      %v923 = vsel %vm611, %v917, %v919
      %v928 = vadd.f32 %v836, %v920
      %v929 = vadd.f32 %v837, %v921
      %v930 = vadd.f32 %v838, %v922
      %v931 = vadd.f32 %v839, %v923
      %932 = vset.pattern.permute.xlu0 2
      %933 = vperm.xlu0 %932, %v666
      %v934 = vpop.permute.xlu0 %933
      %936 = vset.pattern.permute.xlu0 2
      %937 = vperm.xlu0 %936, %v667
      %v938 = vpop.permute.xlu0 %937
      %v940 = vmul.f32 %v682, %v934
      %v941 = vmul.f32 %v683, %v934
      %v942 = vmul.f32 %v684, %v934
      %v943 = vmul.f32 %v685, %v938
      %v944 = vmul.f32 %v686, %v938
      %v945 = vmul.f32 %v687, %v938
      %946 = vset.pattern.permute.xlu0 5
      %947 = vperm.xlu0 %946, %v666
      %v948 = vpop.permute.xlu0 %947
      %950 = vset.pattern.permute.xlu0 5
      %951 = vperm.xlu0 %950, %v667
      %v952 = vpop.permute.xlu0 %951
      %v954 = vmul.f32 %v751, %v948
      %v955 = vmul.f32 %v752, %v948
      %v956 = vmul.f32 %v753, %v948
      %v957 = vmul.f32 %v754, %v952
      %v958 = vmul.f32 %v755, %v952
      %v959 = vmul.f32 %v756, %v952
      %966 = vrot.lane.b32.xlu0 %v954, 112
      %v967 = vpop.permute.xlu0 %966
      %968 = vrot.lane.b32.xlu0 %v955, 112
      %v969 = vpop.permute.xlu0 %968
      %970 = vrot.lane.b32.xlu0 %v956, 112
      %v971 = vpop.permute.xlu0 %970
      %972 = vrot.lane.b32.xlu0 %v957, 112
      %v973 = vpop.permute.xlu0 %972
      %974 = vrot.lane.b32.xlu0 %v958, 112
      %v975 = vpop.permute.xlu0 %974
      %976 = vrot.lane.b32.xlu0 %v959, 112
      %v977 = vpop.permute.xlu0 %976
      %v978 = vsel %vm734, %v967, %v969
      %v979 = vsel %vm734, %v969, %v971
      %v980 = vsel %vm734, %v973, %v975
      %v981 = vsel %vm734, %v975, %v977
      %v988 = vadd.f32 %v940, %v967
      %v989 = vadd.f32 %v941, %v978
      %v990 = vadd.f32 %v942, %v979
      %v991 = vadd.f32 %v943, %v973
      %v992 = vadd.f32 %v944, %v980
      %v993 = vadd.f32 %v945, %v981
      %994 = vset.pattern.permute.xlu0 8
      %995 = vperm.xlu0 %994, %v666
      %v996 = vpop.permute.xlu0 %995
      %998 = vset.pattern.permute.xlu0 8
      %999 = vperm.xlu0 %998, %v667
      %v1000 = vpop.permute.xlu0 %999
      %v1002 = vmul.f32 %v751, %v996
      %v1003 = vmul.f32 %v752, %v996
      %v1004 = vmul.f32 %v753, %v996
      %v1005 = vmul.f32 %v754, %v1000
      %v1006 = vmul.f32 %v755, %v1000
      %v1007 = vmul.f32 %v756, %v1000
      %1014 = vrot.lane.b32.xlu0 %v1002, 96
      %v1015 = vpop.permute.xlu0 %1014
      %1016 = vrot.lane.b32.xlu0 %v1003, 96
      %v1017 = vpop.permute.xlu0 %1016
      %1018 = vrot.lane.b32.xlu0 %v1004, 96
      %v1019 = vpop.permute.xlu0 %1018
      %1020 = vrot.lane.b32.xlu0 %v1005, 96
      %v1021 = vpop.permute.xlu0 %1020
      %1022 = vrot.lane.b32.xlu0 %v1006, 96
      %v1023 = vpop.permute.xlu0 %1022
      %1024 = vrot.lane.b32.xlu0 %v1007, 96
      %v1025 = vpop.permute.xlu0 %1024
      %v1026 = vsel %vm789, %v1015, %v1017
      %v1027 = vsel %vm789, %v1017, %v1019
      %v1028 = vsel %vm789, %v1021, %v1023
      %v1029 = vsel %vm789, %v1023, %v1025
      %v1036 = vadd.f32 %v988, %v1015
      %v1037 = vadd.f32 %v989, %v1026
      %v1038 = vadd.f32 %v990, %v1027
      %v1039 = vadd.f32 %v991, %v1021
      %v1040 = vadd.f32 %v992, %v1028
      %v1041 = vadd.f32 %v993, %v1029
      %1048 = vrot.lane.b32.xlu0 %v1036, 15
      %v1049 = vpop.permute.xlu0 %1048
      %1050 = vrot.lane.b32.xlu0 %v1037, 15
      %v1051 = vpop.permute.xlu0 %1050
      %1052 = vrot.lane.b32.xlu0 %v1038, 15
      %v1053 = vpop.permute.xlu0 %1052
      %1054 = vrot.lane.b32.xlu0 %v1039, 15
      %v1055 = vpop.permute.xlu0 %1054
      %1056 = vrot.lane.b32.xlu0 %v1040, 15
      %v1057 = vpop.permute.xlu0 %1056
      %1058 = vrot.lane.b32.xlu0 %v1041, 15
      %v1059 = vpop.permute.xlu0 %1058
      %v1060 = vsel %vm483, %v1049, %v1051
      %v1061 = vsel %vm483, %v1051, %v1053
      %v1062 = vsel %vm483, %v1055, %v1057
      %v1063 = vsel %vm483, %v1057, %v1059
      %v1068 = vsel %vm457, %v1060, 0.0
      %v1069 = vsel %vm458, %v1061, 0.0
      %v1070 = vsel %vm457, %v1062, 0.0
      %v1071 = vsel %vm458, %v1063, 0.0
      %v1072 = vadd.f32 %v928, %v1068
      %v1073 = vadd.f32 %v929, %v1069
      %v1074 = vadd.f32 %v930, %v1070
      %v1075 = vadd.f32 %v931, %v1071
      %v1076 = vadd.f32 %v1072, %v1074
      %v1077 = vrot.slane %v1076, 4
      %v1078 = vadd.f32 %v1076, %v1077
      %v1079 = vrot.slane %v1078, 2
      %v1080 = vadd.f32 %v1078, %v1079
      %v1081 = vrot.slane %v1080, 1
      %v1082 = vadd.f32 %v1080, %v1081
      %v1083 = vadd.f32 %v1073, %v1075
      %v1084 = vrot.slane %v1083, 4
      %v1085 = vadd.f32 %v1083, %v1084
      %v1086 = vrot.slane %v1085, 2
      %v1087 = vadd.f32 %v1085, %v1086
      %v1088 = vrot.slane %v1087, 1
      %v1089 = vadd.f32 %v1087, %v1088
      %v1092 = vcombine.low %v1082, %v1089
      %v1094 = vunpack.c.l.s4 1966171168
      %v1095 = vunpack.c.0.s8 %v1094
      %v1096 = vlaneseq
      %v1097 = vshrl.u32 %v1096, 7
      %v1098 = vsub.s32 %v1095, %v1097
      %v1099 = vrot.slane %v1092, %v1098
      %v1101 = vunpack.c.l.s4 1966171168
      %v1102 = vunpack.c.0.s8 %v1101
      %v1103 = vlaneseq
      %v1104 = vshrl.u32 %v1103, 7
      %v1105 = vsub.s32 %v1102, %v1104
      %v1106 = vrot.slane %v1099, %v1105
      %v1108 = vlaneseq
      %vm1109 = vcmp.ge.s32.totalorder %v1108, 0
      %vm1110 = vcmp.lt.s32.totalorder %v1108, 256
      %vm1111 = vmand %vm1109, %vm1110
      %1112 = vst.msk [vmem:[%s215] sm:$0x3] %vm1111, %v1106
      %p1113 = scmp.lt.s32.totalorder %s15, 1
      %s1114 = scalar_select %p1113, %s15, 1
      %s1115 = smul.addr %s1114, 2
      %s1116 = scalar_lea.vmem %s4, %s1115
      // Predicated region
      $region37: #{attention_forward.1} parent=35 // pred_check
        %p1117 = pneg %p127
      $region38: #{attention_forward.1} parent=35 // pred_check_branch
        %1119 = sbr.rel (%p1117) target = $region40
      $region39: #{attention_forward.1} parent=35 // pred_region
        _
      $region40: #{attention_forward.1} parent=35 // pred_fallthru
        _
    $region36: #{attention_forward.1} parent=5 // pred_fallthru
      _
    %p1120 = scmp.le.s32.totalorder 2, %s10
    // Predicated region
    $region41: #{attention_forward.1} parent=5 // pred_check
      %p1121 = pneg %p1120
    $region42: #{attention_forward.1} parent=5 // pred_check_branch
      %1123 = sbr.rel (%p1121) target = $region44
    $region43: #{attention_forward.1} parent=5 // pred_region
      %s1124 = ssub.s32 %s10, 2
      // Predicated region
      $region45: #{attention_forward.1} parent=43 // pred_check
        %p1125 = pneg %p133
      $region46: #{attention_forward.1} parent=43 // pred_check_branch
        %1127 = sbr.rel (%p1125) target = $region48
      $region47: #{attention_forward.1} parent=43 // pred_region
        %p1128 = scmp.lt.s32.totalorder %s16, 1
        %s1129 = scalar_select %p1128, %s16, 1
        %s1130 = smul.addr %s1129, 2
        %s1131 = scalar_lea.vmem %s4, %s1130
      $region48: #{attention_forward.1} parent=43 // pred_fallthru
        _
    $region44: #{attention_forward.1} parent=5 // pred_fallthru
      _
  $region6: #{attention_forward.1} parent=0 // loop_footer
    %s14 = sadd.s32 1, %s10
  $region7: #{attention_forward.1} parent=0 // loop_footer_branch
    %9 = sbr.rel target = $region3
  $region8: #{attention_forward.1} parent=0 // loop_exit
    _

</llo_original>
